<compile_context>
chip_gen: v6e
topology: v6e:2x2x1
jax: 0.10.0
libtpu: 0.0.40
codegen_flags: <defaults>
</compile_context>

<pallas_src>
import functools

import jax
import jax.numpy as jnp
from jax.experimental import pallas as pl
from jax.experimental.pallas import tpu as pltpu

BN_EPS = 1e-5

F_IN = 497                 # input features (unpadded, read directly from HBM)
H1, H1_PAD = 192, 256      # hidden width padded to MXU/lane friendly 256
H2 = 128                   # already aligned
LANES = 128
DEFAULT_TILE_B = 2048      # multiple of 1024 (see _choose_tile_b)


def _round_up(n, m):
    return ((n + m - 1) // m) * m


# ---------------------------------------------------------------------------
# Kernel
# ---------------------------------------------------------------------------
def _deep_regressor_kernel(
    x_ref,                       # (TILE_B, 497)  input dtype (f32 or bf16)
    w1_ref, b1_ref,              # (497, 256) bf16, (1, 256) f32   layer1 (+BN) + ReLU
    w2_ref, b2_ref,              # (256, 256) bf16, (1, 256) f32   block1 (+BN) + ReLU + res
    w3_ref, b3_ref,              # (256, 128) bf16, (1, 128) f32   transition (+BN) + ReLU
    w4_ref, b4_ref,              # (128, 128) bf16, (1, 128) f32   block2 (+BN) + ReLU + res
    w5_ref, b5_ref,              # (1, 128)   f32,  (1, 1)   f32   final 128 -> 1
    out_ref,                     # (TILE_B // 128, 128) f32  (lane-dense rows)
):
    tb = x_ref.shape[0]
    x = x_ref[...].astype(jnp.bfloat16)   # cast in-kernel: no wrapper pass over x

    # layer1: 497 -> 256 (padded N), f32 accumulate on the MXU (masked K=497)
    h1 = jnp.dot(x, w1_ref[...], preferred_element_type=jnp.float32) + b1_ref[...]
    h1 = jnp.maximum(h1, 0.0)

    # block1 + residual
    h2 = jnp.dot(h1.astype(jnp.bfloat16), w2_ref[...],
                 preferred_element_type=jnp.float32) + b2_ref[...]
    h2 = jnp.maximum(h2, 0.0) + h1

    # transition: 256 -> 128
    h3 = jnp.dot(h2.astype(jnp.bfloat16), w3_ref[...],
                 preferred_element_type=jnp.float32) + b3_ref[...]
    h3 = jnp.maximum(h3, 0.0)

    # block2 + residual
    h4 = jnp.dot(h3.astype(jnp.bfloat16), w4_ref[...],
                 preferred_element_type=jnp.float32) + b4_ref[...]
    h4 = jnp.maximum(h4, 0.0) + h3

    # final 128 -> 1: VPU multiply + XLU lane reduction (no N=1 MXU pass).
    # Splitting the leading dim (multiple of the sublane tile) is layout-free,
    # so the reduction yields a lane-dense (tb//128, 128) block: full-width
    # vst stores instead of tb/8 masked vst.msk stores.
    v = h4 * w5_ref[...]                                   # (tb, 128) f32
    red = jnp.sum(v.reshape(tb // LANES, LANES, H2), axis=-1)   # (tb//128, 128)
    out_ref[...] = (red + b5_ref[...]).astype(out_ref.dtype)


# ---------------------------------------------------------------------------
# Parameter construction (matches DeepRegressor.__init__ semantics)
# ---------------------------------------------------------------------------
def _fold_bn(w, b, gamma, beta, mean, var):
    """Fold eval-mode BatchNorm1d into the preceding Linear. w: (in, out)."""
    scale = gamma / jnp.sqrt(var + BN_EPS)
    shift = beta - mean * scale
    return w * scale[None, :], b * scale + shift


def init_params(key):
    """Unpadded f32 params: list of (w (in,out), b (1,out)), BN already folded."""
    dims = [(F_IN, H1), (H1, H1), (H1, H2), (H2, H2), (H2, 1)]
    params = []
    for i, (fan_in, fan_out) in enumerate(dims):
        key, sub = jax.random.split(key)
        # kaiming_normal_(mode='fan_in', nonlinearity='relu'): std = sqrt(2 / fan_in)
        std = (2.0 / fan_in) ** 0.5
        w = jax.random.normal(sub, (fan_in, fan_out), dtype=jnp.float32) * std
        b = jnp.zeros((fan_out,), dtype=jnp.float32)
        if i < 4:  # followed by BatchNorm1d with defaults (gamma=1, beta=0, mean=0, var=1)
            ones = jnp.ones((fan_out,), jnp.float32)
            zeros = jnp.zeros((fan_out,), jnp.float32)
            w, b = _fold_bn(w, b, ones, zeros, zeros, ones)
        params.append((w, b.reshape(1, -1)))
    return params


def prepare_kernel_params(params):
    """Pad hidden width 192 -> 256 and cast matmul weights to bf16 (biases f32).

    Padding is exact: padded weight columns / bias lanes are zero, so padded
    activation lanes stay 0 through ReLU and the residual adds.  The input
    feature dim (497) is NOT padded — the kernel contracts over K=497 directly.
    """
    (w1, b1), (w2, b2), (w3, b3), (w4, b4), (w5, b5) = params
    bf = jnp.bfloat16

    w1p = jnp.zeros((F_IN, H1_PAD), jnp.float32).at[:, :H1].set(w1)
    b1p = jnp.zeros((1, H1_PAD), jnp.float32).at[:, :H1].set(b1)
    w2p = jnp.zeros((H1_PAD, H1_PAD), jnp.float32).at[:H1, :H1].set(w2)
    b2p = jnp.zeros((1, H1_PAD), jnp.float32).at[:, :H1].set(b2)
    w3p = jnp.zeros((H1_PAD, H2), jnp.float32).at[:H1, :].set(w3)

    return (
        w1p.astype(bf), b1p,
        w2p.astype(bf), b2p,
        w3p.astype(bf), b3,
        w4.astype(bf), b4,
        w5.reshape(1, H2),          # f32 row for VPU mul + lane reduce
        b5.reshape(1, 1),
    )


# ---------------------------------------------------------------------------
# Tiling
# ---------------------------------------------------------------------------
def _choose_tile_b(B, tile_b):
    """Batch tile: multiple of 128 (lane-dense output) and, for grids with
    more than one step, a multiple of 1024 so the (tb//128, 128) output block
    keeps an 8-aligned sublane dim.  For B > 1024 we guarantee >= 2 grid steps
    (both v7x TensorCores get work) while minimizing padded rows."""
    if B <= 1024:
        return _round_up(max(B, 1), LANES)          # single grid step
    tile_b = max(_round_up(tile_b, 1024), 1024)
    return min(tile_b, _round_up(pl.cdiv(B, 2), 1024))


# ---------------------------------------------------------------------------
# Forward wrapper
# ---------------------------------------------------------------------------
@functools.partial(jax.jit, static_argnames=("tile_b",))
def deep_regressor_forward(x, kparams, tile_b=DEFAULT_TILE_B):
    """x: (B, 497) in f32 or bf16 (bf16 halves the x HBM stream). Returns (B, 1) f32."""
    B = x.shape[0]
    tb = _choose_tile_b(B, tile_b)
    grid = (pl.cdiv(B, tb),)
    rows_pad = grid[0] * tb       # padded rows are edge-block garbage; outputs sliced off

    in_specs = [pl.BlockSpec((tb, F_IN), lambda i: (i, 0))]
    # Weights/biases: constant index_map -> DMA'd once, stay resident in VMEM.
    for p in kparams:
        in_specs.append(pl.BlockSpec(p.shape, lambda i: (0, 0)))

    flops = 2 * rows_pad * (F_IN * H1_PAD + H1_PAD * H1_PAD + H1_PAD * H2
                            + H2 * H2 + H2)
    w_bytes = sum(int(p.size) * p.dtype.itemsize for p in kparams)
    bytes_accessed = int(rows_pad * F_IN * x.dtype.itemsize    # x read
                         + rows_pad * 4                        # output write
                         + w_bytes)                            # resident weights (once)

    out = pl.pallas_call(
        _deep_regressor_kernel,
        out_shape=jax.ShapeDtypeStruct((rows_pad // LANES, LANES), jnp.float32),
        grid=grid,
        in_specs=in_specs,
        out_specs=pl.BlockSpec((tb // LANES, LANES), lambda i: (i, 0)),
        compiler_params=pltpu.CompilerParams(
            dimension_semantics=("parallel",),      # megacore sharding on v7x
            vmem_limit_bytes=32 * 1024 * 1024,      # ample; safe on v7x's 64 MiB
        ),
        cost_estimate=pl.CostEstimate(
            flops=flops, transcendentals=0, bytes_accessed=bytes_accessed),
    )(x, *kparams)

    # Lane-dense (rows_pad//128, 128) -> (B, 1); row i lives at out[i//128, i%128].
    return out.reshape(rows_pad, 1)[:B]


# ---------------------------------------------------------------------------
# Pure-JAX reference (same bf16-input / f32-accumulate numerics as the kernel)
# ---------------------------------------------------------------------------
def _reference_forward(x, params):
    (w1, b1), (w2, b2), (w3, b3), (w4, b4), (w5, b5) = params

    def mm(a, w):
        return jnp.dot(a.astype(jnp.bfloat16), w.astype(jnp.bfloat16),
                       preferred_element_type=jnp.float32)

    h1 = jnp.maximum(mm(x, w1) + b1, 0.0)
    h2 = jnp.maximum(mm(h1, w2) + b2, 0.0) + h1
    h3 = jnp.maximum(mm(h2, w3) + b3, 0.0)
    h4 = jnp.maximum(mm(h3, w4) + b4, 0.0) + h3
    return h4 @ w5 + b5                       # final layer in f32, like the kernel


if __name__ == "__main__":
    key = jax.random.PRNGKey(0)
    key_x, key_p = jax.random.split(key)

    B = 2
    x = jax.random.normal(key_x, (B, F_IN), dtype=jnp.float32)

    params = init_params(key_p)
    kparams = prepare_kernel_params(params)

    out = deep_regressor_forward(x, kparams)
    out = jax.block_until_ready(out)

    ref = _reference_forward(x, params)
    assert out.shape == (B, 1), out.shape
    assert jnp.allclose(out, ref, atol=1e-2, rtol=1e-2), (out, ref)

    print("KERNEL_OK")
</pallas_src>

<mosaic_0001>
module attributes {stable_mosaic.version = 11 : i64} {
  func.func @_deep_regressor_kernel(%arg0: i32, %arg1: memref<128x497xf32, #tpu.memory_space<vmem>>, %arg2: memref<497x256xbf16, #tpu.memory_space<vmem>>, %arg3: memref<1x256xf32, #tpu.memory_space<vmem>>, %arg4: memref<256x256xbf16, #tpu.memory_space<vmem>>, %arg5: memref<1x256xf32, #tpu.memory_space<vmem>>, %arg6: memref<256x128xbf16, #tpu.memory_space<vmem>>, %arg7: memref<1x128xf32, #tpu.memory_space<vmem>>, %arg8: memref<128x128xbf16, #tpu.memory_space<vmem>>, %arg9: memref<1x128xf32, #tpu.memory_space<vmem>>, %arg10: memref<1x128xf32, #tpu.memory_space<vmem>>, %arg11: memref<1x1xf32, #tpu.memory_space<vmem>>, %arg12: memref<1x128xf32, #tpu.memory_space<vmem>>) attributes {dimension_semantics = [#tpu.dimension_semantics<parallel>], iteration_bounds = array<i64: 1>, scalar_prefetch = 0 : i64, scratch_operands = 0 : i64, tpu.core_type = #tpu.core_type<tc>, window_params = [{transform_indices = @transform_0, window_bounds = array<i64: 128, 497>}, {pipeline_mode = #tpu.pipeline_mode<synchronous>, transform_indices = @transform_1, window_bounds = array<i64: 497, 256>}, {pipeline_mode = #tpu.pipeline_mode<synchronous>, transform_indices = @transform_2, window_bounds = array<i64: 1, 256>}, {pipeline_mode = #tpu.pipeline_mode<synchronous>, transform_indices = @transform_3, window_bounds = array<i64: 256, 256>}, {pipeline_mode = #tpu.pipeline_mode<synchronous>, transform_indices = @transform_4, window_bounds = array<i64: 1, 256>}, {pipeline_mode = #tpu.pipeline_mode<synchronous>, transform_indices = @transform_5, window_bounds = array<i64: 256, 128>}, {pipeline_mode = #tpu.pipeline_mode<synchronous>, transform_indices = @transform_6, window_bounds = array<i64: 1, 128>}, {pipeline_mode = #tpu.pipeline_mode<synchronous>, transform_indices = @transform_7, window_bounds = array<i64: 128, 128>}, {pipeline_mode = #tpu.pipeline_mode<synchronous>, transform_indices = @transform_8, window_bounds = array<i64: 1, 128>}, {pipeline_mode = #tpu.pipeline_mode<synchronous>, transform_indices = @transform_9, window_bounds = array<i64: 1, 128>}, {pipeline_mode = #tpu.pipeline_mode<synchronous>, transform_indices = @transform_10, window_bounds = array<i64: 1, 1>}, {transform_indices = @transform_11, window_bounds = array<i64: 1, 128>}]} {
    %c0 = arith.constant 0 : index
    %c0_0 = arith.constant 0 : index
    %0 = vector.load %arg1[%c0, %c0_0] : memref<128x497xf32, #tpu.memory_space<vmem>>, vector<128x497xf32>
    %1 = arith.truncf %0 : vector<128x497xf32> to vector<128x497xbf16>
    %c0_1 = arith.constant 0 : index
    %c0_2 = arith.constant 0 : index
    %2 = vector.load %arg2[%c0_1, %c0_2] : memref<497x256xbf16, #tpu.memory_space<vmem>>, vector<497x256xbf16>
    %cst = arith.constant dense<0.000000e+00> : vector<128x256xf32>
    %3 = tpu.matmul %1, %2, %cst {dimension_numbers = #tpu.dot_dimension_numbers<[1], [0], [0], [1], [0, 0, 1, 1], [], []>} : vector<128x497xbf16>, vector<497x256xbf16>, vector<128x256xf32> -> vector<128x256xf32>
    %c0_3 = arith.constant 0 : index
    %c0_4 = arith.constant 0 : index
    %4 = vector.load %arg3[%c0_3, %c0_4] : memref<1x256xf32, #tpu.memory_space<vmem>>, vector<1x256xf32>
    %5 = vector.broadcast %4 : vector<1x256xf32> to vector<128x256xf32>
    %6 = arith.addf %3, %5 : vector<128x256xf32>
    %cst_5 = arith.constant 0.000000e+00 : f32
    %7 = vector.broadcast %cst_5 : f32 to vector<128x256xf32>
    %8 = arith.maximumf %6, %7 : vector<128x256xf32>
    %9 = arith.truncf %8 : vector<128x256xf32> to vector<128x256xbf16>
    %c0_6 = arith.constant 0 : index
    %c0_7 = arith.constant 0 : index
    %10 = vector.load %arg4[%c0_6, %c0_7] : memref<256x256xbf16, #tpu.memory_space<vmem>>, vector<256x256xbf16>
    %cst_8 = arith.constant dense<0.000000e+00> : vector<128x256xf32>
    %11 = tpu.matmul %9, %10, %cst_8 {dimension_numbers = #tpu.dot_dimension_numbers<[1], [0], [0], [1], [0, 0, 1, 1], [], []>} : vector<128x256xbf16>, vector<256x256xbf16>, vector<128x256xf32> -> vector<128x256xf32>
    %c0_9 = arith.constant 0 : index
    %c0_10 = arith.constant 0 : index
    %12 = vector.load %arg5[%c0_9, %c0_10] : memref<1x256xf32, #tpu.memory_space<vmem>>, vector<1x256xf32>
    %13 = vector.broadcast %12 : vector<1x256xf32> to vector<128x256xf32>
    %14 = arith.addf %11, %13 : vector<128x256xf32>
    %cst_11 = arith.constant 0.000000e+00 : f32
    %15 = vector.broadcast %cst_11 : f32 to vector<128x256xf32>
    %16 = arith.maximumf %14, %15 : vector<128x256xf32>
    %17 = arith.addf %16, %8 : vector<128x256xf32>
    %18 = arith.truncf %17 : vector<128x256xf32> to vector<128x256xbf16>
    %c0_12 = arith.constant 0 : index
    %c0_13 = arith.constant 0 : index
    %19 = vector.load %arg6[%c0_12, %c0_13] : memref<256x128xbf16, #tpu.memory_space<vmem>>, vector<256x128xbf16>
    %cst_14 = arith.constant dense<0.000000e+00> : vector<128x128xf32>
    %20 = tpu.matmul %18, %19, %cst_14 {dimension_numbers = #tpu.dot_dimension_numbers<[1], [0], [0], [1], [0, 0, 1, 1], [], []>} : vector<128x256xbf16>, vector<256x128xbf16>, vector<128x128xf32> -> vector<128x128xf32>
    %c0_15 = arith.constant 0 : index
    %c0_16 = arith.constant 0 : index
    %21 = vector.load %arg7[%c0_15, %c0_16] : memref<1x128xf32, #tpu.memory_space<vmem>>, vector<1x128xf32>
    %22 = vector.broadcast %21 : vector<1x128xf32> to vector<128x128xf32>
    %23 = arith.addf %20, %22 : vector<128x128xf32>
    %cst_17 = arith.constant 0.000000e+00 : f32
    %24 = vector.broadcast %cst_17 : f32 to vector<128x128xf32>
    %25 = arith.maximumf %23, %24 : vector<128x128xf32>
    %26 = arith.truncf %25 : vector<128x128xf32> to vector<128x128xbf16>
    %c0_18 = arith.constant 0 : index
    %c0_19 = arith.constant 0 : index
    %27 = vector.load %arg8[%c0_18, %c0_19] : memref<128x128xbf16, #tpu.memory_space<vmem>>, vector<128x128xbf16>
    %cst_20 = arith.constant dense<0.000000e+00> : vector<128x128xf32>
    %28 = tpu.matmul %26, %27, %cst_20 {dimension_numbers = #tpu.dot_dimension_numbers<[1], [0], [0], [1], [0, 0, 1, 1], [], []>} : vector<128x128xbf16>, vector<128x128xbf16>, vector<128x128xf32> -> vector<128x128xf32>
    %c0_21 = arith.constant 0 : index
    %c0_22 = arith.constant 0 : index
    %29 = vector.load %arg9[%c0_21, %c0_22] : memref<1x128xf32, #tpu.memory_space<vmem>>, vector<1x128xf32>
    %30 = vector.broadcast %29 : vector<1x128xf32> to vector<128x128xf32>
    %31 = arith.addf %28, %30 : vector<128x128xf32>
    %cst_23 = arith.constant 0.000000e+00 : f32
    %32 = vector.broadcast %cst_23 : f32 to vector<128x128xf32>
    %33 = arith.maximumf %31, %32 : vector<128x128xf32>
    %34 = arith.addf %33, %25 : vector<128x128xf32>
    %c0_24 = arith.constant 0 : index
    %c0_25 = arith.constant 0 : index
    %35 = vector.load %arg10[%c0_24, %c0_25] : memref<1x128xf32, #tpu.memory_space<vmem>>, vector<1x128xf32>
    %36 = vector.broadcast %35 : vector<1x128xf32> to vector<128x128xf32>
    %37 = arith.mulf %34, %36 : vector<128x128xf32>
    %38 = vector.shape_cast %37 : vector<128x128xf32> to vector<1x128x128xf32>
    %cst_26 = arith.constant dense<0.000000e+00> : vector<1x128xf32>
    %39 = vector.multi_reduction <add>, %38, %cst_26 [2] : vector<1x128x128xf32> to vector<1x128xf32>
    %c0_27 = arith.constant 0 : index
    %c0_28 = arith.constant 0 : index
    %40 = vector.load %arg11[%c0_27, %c0_28] : memref<1x1xf32, #tpu.memory_space<vmem>>, vector<1x1xf32>
    %41 = vector.broadcast %40 : vector<1x1xf32> to vector<1x128xf32>
    %42 = arith.addf %39, %41 : vector<1x128xf32>
    %c0_29 = arith.constant 0 : index
    %c0_30 = arith.constant 0 : index
    %43 = vector.load %arg12[%c0_29, %c0_30] : memref<1x128xf32, #tpu.memory_space<vmem>>, vector<1x128xf32>
    tpu.vector_store %arg12[%c0_29, %c0_30], %42 {strides = array<i32>} : memref<1x128xf32, #tpu.memory_space<vmem>>, vector<1x128xf32>,
    return
  }
  func.func @transform_0(%arg0: i32) -> (i32, i32) {
    %c0_i32 = arith.constant 0 : i32
    %c0_i32_0 = arith.constant 0 : i32
    return %arg0, %c0_i32 : i32, i32
  }
  func.func @transform_1(%arg0: i32) -> (i32, i32) {
    %c0_i32 = arith.constant 0 : i32
    %c0_i32_0 = arith.constant 0 : i32
    %c0_i32_1 = arith.constant 0 : i32
    return %c0_i32, %c0_i32_0 : i32, i32
  }
  func.func @transform_2(%arg0: i32) -> (i32, i32) {
    %c0_i32 = arith.constant 0 : i32
    %c0_i32_0 = arith.constant 0 : i32
    %c0_i32_1 = arith.constant 0 : i32
    return %c0_i32, %c0_i32_0 : i32, i32
  }
  func.func @transform_3(%arg0: i32) -> (i32, i32) {
    %c0_i32 = arith.constant 0 : i32
    %c0_i32_0 = arith.constant 0 : i32
    %c0_i32_1 = arith.constant 0 : i32
    return %c0_i32, %c0_i32_0 : i32, i32
  }
  func.func @transform_4(%arg0: i32) -> (i32, i32) {
    %c0_i32 = arith.constant 0 : i32
    %c0_i32_0 = arith.constant 0 : i32
    %c0_i32_1 = arith.constant 0 : i32
    return %c0_i32, %c0_i32_0 : i32, i32
  }
  func.func @transform_5(%arg0: i32) -> (i32, i32) {
    %c0_i32 = arith.constant 0 : i32
    %c0_i32_0 = arith.constant 0 : i32
    %c0_i32_1 = arith.constant 0 : i32
    return %c0_i32, %c0_i32_0 : i32, i32
  }
  func.func @transform_6(%arg0: i32) -> (i32, i32) {
    %c0_i32 = arith.constant 0 : i32
    %c0_i32_0 = arith.constant 0 : i32
    %c0_i32_1 = arith.constant 0 : i32
    return %c0_i32, %c0_i32_0 : i32, i32
  }
  func.func @transform_7(%arg0: i32) -> (i32, i32) {
    %c0_i32 = arith.constant 0 : i32
    %c0_i32_0 = arith.constant 0 : i32
    %c0_i32_1 = arith.constant 0 : i32
    return %c0_i32, %c0_i32_0 : i32, i32
  }
  func.func @transform_8(%arg0: i32) -> (i32, i32) {
    %c0_i32 = arith.constant 0 : i32
    %c0_i32_0 = arith.constant 0 : i32
    %c0_i32_1 = arith.constant 0 : i32
    return %c0_i32, %c0_i32_0 : i32, i32
  }
  func.func @transform_9(%arg0: i32) -> (i32, i32) {
    %c0_i32 = arith.constant 0 : i32
    %c0_i32_0 = arith.constant 0 : i32
    %c0_i32_1 = arith.constant 0 : i32
    return %c0_i32, %c0_i32_0 : i32, i32
  }
  func.func @transform_10(%arg0: i32) -> (i32, i32) {
    %c0_i32 = arith.constant 0 : i32
    %c0_i32_0 = arith.constant 0 : i32
    %c0_i32_1 = arith.constant 0 : i32
    return %c0_i32, %c0_i32_0 : i32, i32
  }
  func.func @transform_11(%arg0: i32) -> (i32, i32) {
    %c0_i32 = arith.constant 0 : i32
    %c0_i32_0 = arith.constant 0 : i32
    return %arg0, %c0_i32 : i32, i32
  }
}

</mosaic_0001>

<llo_original>
// kernel: deep_regressor_forward.1
$region0: #{deep_regressor_forward.1}
  #allocation0 [shape = 'u32[]', space=smem, size = 0x4, offset = 0x4, fixed_abs, tag = 'smem constant byte address 0x4 - core index']
  #allocation1 [shape = 'u32[144,128]{1,0:T(1,128)}', space=vmem, size = 0x12000, scoped, tag = 'internal scratch']
  #allocation2 [shape = 'f32[1,1]{1,0:T(1,128)S(1)}', space=vmem, size = 0x200, scoped, tag = 'scoped memory for deep_regressor_forward.1']
  %s0 = inlined_call_operand.hbm [shape: f32[2,497], index: 0, kind: input, shape index: {}]
  %s1 = inlined_call_operand.hbm [shape: bf16[497,256], index: 1, kind: input, shape index: {}]
  %s2 = inlined_call_operand.vmem [shape: f32[1,256], index: 2, kind: input, shape index: {}]
  %s3 = inlined_call_operand.hbm [shape: bf16[256,256], index: 3, kind: input, shape index: {}]
  %s4 = inlined_call_operand.vmem [shape: f32[1,256], index: 4, kind: input, shape index: {}]
  %s5 = inlined_call_operand.hbm [shape: bf16[256,128], index: 5, kind: input, shape index: {}]
  %s6 = inlined_call_operand.vmem [shape: f32[1,128], index: 6, kind: input, shape index: {}]
  %s7 = inlined_call_operand.hbm [shape: bf16[128,128], index: 7, kind: input, shape index: {}]
  %s8 = inlined_call_operand.vmem [shape: f32[1,128], index: 8, kind: input, shape index: {}]
  %s9 = inlined_call_operand.vmem [shape: f32[1,128], index: 9, kind: input, shape index: {}]
  %s10 = inlined_call_operand.<no memory space> [shape: f32[1,1], index: 10, kind: input, shape index: {}]
  %s11 = inlined_call_operand.vmem [shape: f32[1,128], index: 11, kind: output, shape index: {}]
  %s12 = sld [smem:[#allocation0]]
  $region74: #{deep_regressor_forward.1} parent=0
    _
  %s14 = ssub.s32 1, %s12
  %s15 = scalar_select 0, %s14, %s12
  %v16 = vstv %s10
  %17 = vst [vmem:[#allocation2] sm:$0x1] %v16
  $region1: #{deep_regressor_forward.1} parent=0
    #allocation3 [shape = 'u8[262144]{0}', space=vmem, size = 0x40000, scoped, tag = 'input window, operand 0, single buffered']
    #allocation4 [shape = 's32[1]{0}', space=sflag, size = 0x4, scoped, tag = 'scoped memory for deep_regressor_forward.1']
    #allocation5 [shape = 'u8[258048]{0}', space=vmem, size = 0x3f000, scoped, tag = 'input window, operand 1, single buffered']
    #allocation6 [shape = 's32[1]{0}', space=sflag, size = 0x4, scoped, tag = 'scoped memory for deep_regressor_forward.1']
    #allocation7 [shape = 'u8[131072]{0}', space=vmem, size = 0x20000, scoped, tag = 'input window, operand 3, single buffered']
    #allocation8 [shape = 'u8[65536]{0}', space=vmem, size = 0x10000, scoped, tag = 'input window, operand 5, single buffered']
    #allocation9 [shape = 's32[1]{0}', space=sflag, size = 0x4, scoped, tag = 'scoped memory for deep_regressor_forward.1']
    #allocation10 [shape = 'u8[32768]{0}', space=vmem, size = 0x8000, scoped, tag = 'input window, operand 7, single buffered']
    %18 = vsyncpa [#allocation4], 0
    %19 = vsyncpa [#allocation6], 0
    %20 = vsyncpa [#allocation9], 0
    // Predicated region
    $region2: #{deep_regressor_forward.1} parent=1 // pred_check
      _
    $region3: #{deep_regressor_forward.1} parent=1 // pred_check_branch
      %22 = sbr.rel (0) target = $region5
    $region4: #{deep_regressor_forward.1} parent=1 // pred_region
      %s24 = ssub.s32 8192, 128
      %25 = vsyncadd [#allocation4], %s24
      %s26 = sshll.u32 [#allocation3], 4
      %s27 = int_to_ptr.vmem [resolvable:$true] %s26
      %32 = dma.hbm_to_vmem [thread:$0]  %s0, 128, %s27, [#allocation4], 128, 128, 8
    $region5: #{deep_regressor_forward.1} parent=1 // pred_fallthru
      _
    // Predicated region
    $region6: #{deep_regressor_forward.1} parent=1 // pred_check
      _
    $region7: #{deep_regressor_forward.1} parent=1 // pred_check_branch
      %34 = sbr.rel (0) target = $region9
    $region8: #{deep_regressor_forward.1} parent=1 // pred_region
      %s36 = ssub.s32 8064, 8064
      %37 = vsyncadd [#allocation6], %s36
      %s38 = sshll.u32 [#allocation5], 4
      %s39 = int_to_ptr.vmem [resolvable:$true] %s38
      %44 = dma.hbm_to_vmem [thread:$0]  %s1, 8064, %s39, [#allocation6], 128, 128, 8
    $region9: #{deep_regressor_forward.1} parent=1 // pred_fallthru
      _
    // Predicated region
    $region10: #{deep_regressor_forward.1} parent=1 // pred_check
      _
    $region11: #{deep_regressor_forward.1} parent=1 // pred_check_branch
      %46 = sbr.rel (0) target = $region13
    $region12: #{deep_regressor_forward.1} parent=1 // pred_region
      _
    $region13: #{deep_regressor_forward.1} parent=1 // pred_fallthru
      _
    // Predicated region
    $region14: #{deep_regressor_forward.1} parent=1 // pred_check
      _
    $region15: #{deep_regressor_forward.1} parent=1 // pred_check_branch
      %48 = sbr.rel (0) target = $region17
    $region16: #{deep_regressor_forward.1} parent=1 // pred_region
      %s50 = ssub.s32 4096, 4096
      %51 = vsyncadd [#allocation6], %s50
      %s52 = sshll.u32 [#allocation7], 4
      %s53 = int_to_ptr.vmem [resolvable:$true] %s52
      %58 = dma.hbm_to_vmem [thread:$0]  %s3, 4096, %s53, [#allocation6], 128, 128, 8
    $region17: #{deep_regressor_forward.1} parent=1 // pred_fallthru
      _
    // Predicated region
    $region18: #{deep_regressor_forward.1} parent=1 // pred_check
      _
    $region19: #{deep_regressor_forward.1} parent=1 // pred_check_branch
      %60 = sbr.rel (0) target = $region21
    $region20: #{deep_regressor_forward.1} parent=1 // pred_region
      _
    $region21: #{deep_regressor_forward.1} parent=1 // pred_fallthru
      _
    // Predicated region
    $region22: #{deep_regressor_forward.1} parent=1 // pred_check
      _
    $region23: #{deep_regressor_forward.1} parent=1 // pred_check_branch
      %62 = sbr.rel (0) target = $region25
    $region24: #{deep_regressor_forward.1} parent=1 // pred_region
      %s64 = ssub.s32 2048, 2048
      %65 = vsyncadd [#allocation9], %s64
      %s66 = sshll.u32 [#allocation8], 4
      %s67 = int_to_ptr.vmem [resolvable:$true] %s66
      %72 = dma.hbm_to_vmem [thread:$0]  %s5, 2048, %s67, [#allocation9], 64, 64, 4
    $region25: #{deep_regressor_forward.1} parent=1 // pred_fallthru
      _
    // Predicated region
    $region26: #{deep_regressor_forward.1} parent=1 // pred_check
      _
    $region27: #{deep_regressor_forward.1} parent=1 // pred_check_branch
      %74 = sbr.rel (0) target = $region29
    $region28: #{deep_regressor_forward.1} parent=1 // pred_region
      _
    $region29: #{deep_regressor_forward.1} parent=1 // pred_fallthru
      _
    // Predicated region
    $region30: #{deep_regressor_forward.1} parent=1 // pred_check
      _
    $region31: #{deep_regressor_forward.1} parent=1 // pred_check_branch
      %76 = sbr.rel (0) target = $region33
    $region32: #{deep_regressor_forward.1} parent=1 // pred_region
      %s78 = ssub.s32 1024, 1024
      %79 = vsyncadd [#allocation9], %s78
      %s80 = sshll.u32 [#allocation10], 4
      %s81 = int_to_ptr.vmem [resolvable:$true] %s80
      %86 = dma.hbm_to_vmem [thread:$0]  %s7, 1024, %s81, [#allocation9], 64, 64, 4
    $region33: #{deep_regressor_forward.1} parent=1 // pred_fallthru
      _
    // Predicated region
    $region34: #{deep_regressor_forward.1} parent=1 // pred_check
      _
    $region35: #{deep_regressor_forward.1} parent=1 // pred_check_branch
      %88 = sbr.rel (0) target = $region37
    $region36: #{deep_regressor_forward.1} parent=1 // pred_region
      _
    $region37: #{deep_regressor_forward.1} parent=1 // pred_fallthru
      _
    // Predicated region
    $region38: #{deep_regressor_forward.1} parent=1 // pred_check
      _
    $region39: #{deep_regressor_forward.1} parent=1 // pred_check_branch
      %90 = sbr.rel (0) target = $region41
    $region40: #{deep_regressor_forward.1} parent=1 // pred_region
      _
    $region41: #{deep_regressor_forward.1} parent=1 // pred_fallthru
      _
    // Predicated region
    $region42: #{deep_regressor_forward.1} parent=1 // pred_check
      _
    $region43: #{deep_regressor_forward.1} parent=1 // pred_check_branch
      %92 = sbr.rel (0) target = $region45
    $region44: #{deep_regressor_forward.1} parent=1 // pred_region
      _
    $region45: #{deep_regressor_forward.1} parent=1 // pred_fallthru
      _
    // Predicated region
    $region46: #{deep_regressor_forward.1} parent=1 // pred_check
      _
    $region47: #{deep_regressor_forward.1} parent=1 // pred_check_branch
      %94 = sbr.rel (0) target = $region49
    $region48: #{deep_regressor_forward.1} parent=1 // pred_region
      %95 = dma.done [#allocation4], 8192
    $region49: #{deep_regressor_forward.1} parent=1 // pred_fallthru
      _
    // Predicated region
    $region50: #{deep_regressor_forward.1} parent=1 // pred_check
      _
    $region51: #{deep_regressor_forward.1} parent=1 // pred_check_branch
      %97 = sbr.rel (0) target = $region53
    $region52: #{deep_regressor_forward.1} parent=1 // pred_region
      %98 = dma.done [#allocation6], 8064
    $region53: #{deep_regressor_forward.1} parent=1 // pred_fallthru
      _
    // Predicated region
    $region54: #{deep_regressor_forward.1} parent=1 // pred_check
      _
    $region55: #{deep_regressor_forward.1} parent=1 // pred_check_branch
      %100 = sbr.rel (0) target = $region57
    $region56: #{deep_regressor_forward.1} parent=1 // pred_region
      %101 = dma.done [#allocation6], 4096
    $region57: #{deep_regressor_forward.1} parent=1 // pred_fallthru
      _
    // Predicated region
    $region58: #{deep_regressor_forward.1} parent=1 // pred_check
      _
    $region59: #{deep_regressor_forward.1} parent=1 // pred_check_branch
      %103 = sbr.rel (0) target = $region61
    $region60: #{deep_regressor_forward.1} parent=1 // pred_region
      %104 = dma.done [#allocation9], 2048
    $region61: #{deep_regressor_forward.1} parent=1 // pred_fallthru
      _
    // Predicated region
    $region62: #{deep_regressor_forward.1} parent=1 // pred_check
      _
    $region63: #{deep_regressor_forward.1} parent=1 // pred_check_branch
      %106 = sbr.rel (0) target = $region65
    $region64: #{deep_regressor_forward.1} parent=1 // pred_region
      %107 = dma.done [#allocation9], 1024
    $region65: #{deep_regressor_forward.1} parent=1 // pred_fallthru
      _
    %v109 = vld [vmem:[#allocation3] sm:$0xff]
    %v110 = vld [vmem:[#allocation3 + $0x8] sm:$0xff]
    %v111 = vld [vmem:[#allocation3 + $0x10] sm:$0xff]
    %v112 = vld [vmem:[#allocation3 + $0x18] sm:$0xff]
    %v113 = vld [vmem:[#allocation3 + $0x20] sm:$0xff]
    %v114 = vld [vmem:[#allocation3 + $0x28] sm:$0xff]
    %v115 = vld [vmem:[#allocation3 + $0x30] sm:$0xff]
    %v116 = vld [vmem:[#allocation3 + $0x38] sm:$0xff]
    %v117 = vld [vmem:[#allocation3 + $0x40] sm:$0xff]
    %v118 = vld [vmem:[#allocation3 + $0x48] sm:$0xff]
    %v119 = vld [vmem:[#allocation3 + $0x50] sm:$0xff]
    %v120 = vld [vmem:[#allocation3 + $0x58] sm:$0xff]
    %v121 = vld [vmem:[#allocation3 + $0x60] sm:$0xff]
    %v122 = vld [vmem:[#allocation3 + $0x68] sm:$0xff]
    %v123 = vld [vmem:[#allocation3 + $0x70] sm:$0xff]
    %v124 = vld [vmem:[#allocation3 + $0x78] sm:$0xff]
    %v125 = vld [vmem:[#allocation3 + $0x80] sm:$0xff]
    %v126 = vld [vmem:[#allocation3 + $0x88] sm:$0xff]
    %v127 = vld [vmem:[#allocation3 + $0x90] sm:$0xff]
    %v128 = vld [vmem:[#allocation3 + $0x98] sm:$0xff]
    %v129 = vld [vmem:[#allocation3 + $0xa0] sm:$0xff]
    %v130 = vld [vmem:[#allocation3 + $0xa8] sm:$0xff]
    %v131 = vld [vmem:[#allocation3 + $0xb0] sm:$0xff]
    %v132 = vld [vmem:[#allocation3 + $0xb8] sm:$0xff]
    %v133 = vld [vmem:[#allocation3 + $0xc0] sm:$0xff]
    %v134 = vld [vmem:[#allocation3 + $0xc8] sm:$0xff]
    %v135 = vld [vmem:[#allocation3 + $0xd0] sm:$0xff]
    %v136 = vld [vmem:[#allocation3 + $0xd8] sm:$0xff]
    %v137 = vld [vmem:[#allocation3 + $0xe0] sm:$0xff]
    %v138 = vld [vmem:[#allocation3 + $0xe8] sm:$0xff]
    %v139 = vld [vmem:[#allocation3 + $0xf0] sm:$0xff]
    %v140 = vld [vmem:[#allocation3 + $0xf8] sm:$0xff]
    %v141 = vld [vmem:[#allocation3 + $0x100] sm:$0xff]
    %v142 = vld [vmem:[#allocation3 + $0x108] sm:$0xff]
    %v143 = vld [vmem:[#allocation3 + $0x110] sm:$0xff]
    %v144 = vld [vmem:[#allocation3 + $0x118] sm:$0xff]
    %v145 = vld [vmem:[#allocation3 + $0x120] sm:$0xff]
    %v146 = vld [vmem:[#allocation3 + $0x128] sm:$0xff]
    %v147 = vld [vmem:[#allocation3 + $0x130] sm:$0xff]
    %v148 = vld [vmem:[#allocation3 + $0x138] sm:$0xff]
    %v149 = vld [vmem:[#allocation3 + $0x140] sm:$0xff]
    %v150 = vld [vmem:[#allocation3 + $0x148] sm:$0xff]
    %v151 = vld [vmem:[#allocation3 + $0x150] sm:$0xff]
    %v152 = vld [vmem:[#allocation3 + $0x158] sm:$0xff]
    %v153 = vld [vmem:[#allocation3 + $0x160] sm:$0xff]
    %v154 = vld [vmem:[#allocation3 + $0x168] sm:$0xff]
    %v155 = vld [vmem:[#allocation3 + $0x170] sm:$0xff]
    %v156 = vld [vmem:[#allocation3 + $0x178] sm:$0xff]
    %v157 = vld [vmem:[#allocation3 + $0x180] sm:$0xff]
    %v158 = vld [vmem:[#allocation3 + $0x188] sm:$0xff]
    %v159 = vld [vmem:[#allocation3 + $0x190] sm:$0xff]
    %v160 = vld [vmem:[#allocation3 + $0x198] sm:$0xff]
    %v161 = vld [vmem:[#allocation3 + $0x1a0] sm:$0xff]
    %v162 = vld [vmem:[#allocation3 + $0x1a8] sm:$0xff]
    %v163 = vld [vmem:[#allocation3 + $0x1b0] sm:$0xff]
    %v164 = vld [vmem:[#allocation3 + $0x1b8] sm:$0xff]
    %v165 = vld [vmem:[#allocation3 + $0x1c0] sm:$0xff]
    %v166 = vld [vmem:[#allocation3 + $0x1c8] sm:$0xff]
    %v167 = vld [vmem:[#allocation3 + $0x1d0] sm:$0xff]
    %v168 = vld [vmem:[#allocation3 + $0x1d8] sm:$0xff]
    %v169 = vld [vmem:[#allocation3 + $0x1e0] sm:$0xff]
    %v170 = vld [vmem:[#allocation3 + $0x1e8] sm:$0xff]
    %v171 = vld [vmem:[#allocation3 + $0x1f0] sm:$0xff]
    %v172 = vld [vmem:[#allocation3 + $0x1f8] sm:$0xff]
    %v237 = vcombine.low %v109, %v110
    %v238 = vcombine.high %v109, %v110
    %v239 = vcombine.low %v111, %v112
    %v240 = vcombine.high %v111, %v112
    %v242 = vunpack.c.l.s4 1983009808
    %v243 = vunpack.c.0.s8 %v242
    %v244 = vlaneseq
    %v245 = vshrl.u32 %v244, 7
    %v246 = vsub.s32 %v243, %v245
    %v247 = vrot.slane %v237, %v246
    %v249 = vunpack.c.l.s4 1983009808
    %v250 = vunpack.c.0.s8 %v249
    %v251 = vlaneseq
    %v252 = vshrl.u32 %v251, 7
    %v253 = vsub.s32 %v250, %v252
    %v254 = vrot.slane %v238, %v253
    %v256 = vunpack.c.l.s4 1983009808
    %v257 = vunpack.c.0.s8 %v256
    %v258 = vlaneseq
    %v259 = vshrl.u32 %v258, 7
    %v260 = vsub.s32 %v257, %v259
    %v261 = vrot.slane %v239, %v260
    %v263 = vunpack.c.l.s4 1983009808
    %v264 = vunpack.c.0.s8 %v263
    %v265 = vlaneseq
    %v266 = vshrl.u32 %v265, 7
    %v267 = vsub.s32 %v264, %v266
    %v268 = vrot.slane %v240, %v267
    %v269 = vcombine.low %v247, %v261
    %v270 = vcombine.high %v247, %v261
    %v271 = vcombine.low %v254, %v268
    %v272 = vcombine.high %v254, %v268
    %v273 = vcombine.low %v113, %v114
    %v274 = vcombine.high %v113, %v114
    %v275 = vcombine.low %v115, %v116
    %v276 = vcombine.high %v115, %v116
    %v278 = vunpack.c.l.s4 1983009808
    %v279 = vunpack.c.0.s8 %v278
    %v280 = vlaneseq
    %v281 = vshrl.u32 %v280, 7
    %v282 = vsub.s32 %v279, %v281
    %v283 = vrot.slane %v273, %v282
    %v285 = vunpack.c.l.s4 1983009808
    %v286 = vunpack.c.0.s8 %v285
    %v287 = vlaneseq
    %v288 = vshrl.u32 %v287, 7
    %v289 = vsub.s32 %v286, %v288
    %v290 = vrot.slane %v274, %v289
    %v292 = vunpack.c.l.s4 1983009808
    %v293 = vunpack.c.0.s8 %v292
    %v294 = vlaneseq
    %v295 = vshrl.u32 %v294, 7
    %v296 = vsub.s32 %v293, %v295
    %v297 = vrot.slane %v275, %v296
    %v299 = vunpack.c.l.s4 1983009808
    %v300 = vunpack.c.0.s8 %v299
    %v301 = vlaneseq
    %v302 = vshrl.u32 %v301, 7
    %v303 = vsub.s32 %v300, %v302
    %v304 = vrot.slane %v276, %v303
    %v305 = vcombine.low %v283, %v297
    %v306 = vcombine.high %v283, %v297
    %v307 = vcombine.low %v290, %v304
    %v308 = vcombine.high %v290, %v304
    %v309 = vcombine.low %v117, %v118
    %v310 = vcombine.high %v117, %v118
    %v311 = vcombine.low %v119, %v120
    %v312 = vcombine.high %v119, %v120
    %v314 = vunpack.c.l.s4 1983009808
    %v315 = vunpack.c.0.s8 %v314
    %v316 = vlaneseq
    %v317 = vshrl.u32 %v316, 7
    %v318 = vsub.s32 %v315, %v317
    %v319 = vrot.slane %v309, %v318
    %v321 = vunpack.c.l.s4 1983009808
    %v322 = vunpack.c.0.s8 %v321
    %v323 = vlaneseq
    %v324 = vshrl.u32 %v323, 7
    %v325 = vsub.s32 %v322, %v324
    %v326 = vrot.slane %v310, %v325
    %v328 = vunpack.c.l.s4 1983009808
    %v329 = vunpack.c.0.s8 %v328
    %v330 = vlaneseq
    %v331 = vshrl.u32 %v330, 7
    %v332 = vsub.s32 %v329, %v331
    %v333 = vrot.slane %v311, %v332
    %v335 = vunpack.c.l.s4 1983009808
    %v336 = vunpack.c.0.s8 %v335
    %v337 = vlaneseq
    %v338 = vshrl.u32 %v337, 7
    %v339 = vsub.s32 %v336, %v338
    %v340 = vrot.slane %v312, %v339
    %v341 = vcombine.low %v319, %v333
    %v342 = vcombine.high %v319, %v333
    %v343 = vcombine.low %v326, %v340
    %v344 = vcombine.high %v326, %v340
    %v345 = vcombine.low %v121, %v122
    %v346 = vcombine.high %v121, %v122
    %v347 = vcombine.low %v123, %v124
    %v348 = vcombine.high %v123, %v124
    %v350 = vunpack.c.l.s4 1983009808
    %v351 = vunpack.c.0.s8 %v350
    %v352 = vlaneseq
    %v353 = vshrl.u32 %v352, 7
    %v354 = vsub.s32 %v351, %v353
    %v355 = vrot.slane %v345, %v354
    %v357 = vunpack.c.l.s4 1983009808
    %v358 = vunpack.c.0.s8 %v357
    %v359 = vlaneseq
    %v360 = vshrl.u32 %v359, 7
    %v361 = vsub.s32 %v358, %v360
    %v362 = vrot.slane %v346, %v361
    %v364 = vunpack.c.l.s4 1983009808
    %v365 = vunpack.c.0.s8 %v364
    %v366 = vlaneseq
    %v367 = vshrl.u32 %v366, 7
    %v368 = vsub.s32 %v365, %v367
    %v369 = vrot.slane %v347, %v368
    %v371 = vunpack.c.l.s4 1983009808
    %v372 = vunpack.c.0.s8 %v371
    %v373 = vlaneseq
    %v374 = vshrl.u32 %v373, 7
    %v375 = vsub.s32 %v372, %v374
    %v376 = vrot.slane %v348, %v375
    %v377 = vcombine.low %v355, %v369
    %v378 = vcombine.high %v355, %v369
    %v379 = vcombine.low %v362, %v376
    %v380 = vcombine.high %v362, %v376
    %v381 = vcombine.low %v125, %v126
    %v382 = vcombine.high %v125, %v126
    %v383 = vcombine.low %v127, %v128
    %v384 = vcombine.high %v127, %v128
    %v386 = vunpack.c.l.s4 1983009808
    %v387 = vunpack.c.0.s8 %v386
    %v388 = vlaneseq
    %v389 = vshrl.u32 %v388, 7
    %v390 = vsub.s32 %v387, %v389
    %v391 = vrot.slane %v381, %v390
    %v393 = vunpack.c.l.s4 1983009808
    %v394 = vunpack.c.0.s8 %v393
    %v395 = vlaneseq
    %v396 = vshrl.u32 %v395, 7
    %v397 = vsub.s32 %v394, %v396
    %v398 = vrot.slane %v382, %v397
    %v400 = vunpack.c.l.s4 1983009808
    %v401 = vunpack.c.0.s8 %v400
    %v402 = vlaneseq
    %v403 = vshrl.u32 %v402, 7
    %v404 = vsub.s32 %v401, %v403
    %v405 = vrot.slane %v383, %v404
    %v407 = vunpack.c.l.s4 1983009808
    %v408 = vunpack.c.0.s8 %v407
    %v409 = vlaneseq
    %v410 = vshrl.u32 %v409, 7
    %v411 = vsub.s32 %v408, %v410
    %v412 = vrot.slane %v384, %v411
    %v413 = vcombine.low %v391, %v405
    %v414 = vcombine.high %v391, %v405
    %v415 = vcombine.low %v398, %v412
    %v416 = vcombine.high %v398, %v412
    %v417 = vcombine.low %v129, %v130
    %v418 = vcombine.high %v129, %v130
    %v419 = vcombine.low %v131, %v132
    %v420 = vcombine.high %v131, %v132
    %v422 = vunpack.c.l.s4 1983009808
    %v423 = vunpack.c.0.s8 %v422
    %v424 = vlaneseq
    %v425 = vshrl.u32 %v424, 7
    %v426 = vsub.s32 %v423, %v425
    %v427 = vrot.slane %v417, %v426
    %v429 = vunpack.c.l.s4 1983009808
    %v430 = vunpack.c.0.s8 %v429
    %v431 = vlaneseq
    %v432 = vshrl.u32 %v431, 7
    %v433 = vsub.s32 %v430, %v432
    %v434 = vrot.slane %v418, %v433
    %v436 = vunpack.c.l.s4 1983009808
    %v437 = vunpack.c.0.s8 %v436
    %v438 = vlaneseq
    %v439 = vshrl.u32 %v438, 7
    %v440 = vsub.s32 %v437, %v439
    %v441 = vrot.slane %v419, %v440
    %v443 = vunpack.c.l.s4 1983009808
    %v444 = vunpack.c.0.s8 %v443
    %v445 = vlaneseq
    %v446 = vshrl.u32 %v445, 7
    %v447 = vsub.s32 %v444, %v446
    %v448 = vrot.slane %v420, %v447
    %v449 = vcombine.low %v427, %v441
    %v450 = vcombine.high %v427, %v441
    %v451 = vcombine.low %v434, %v448
    %v452 = vcombine.high %v434, %v448
    %v453 = vcombine.low %v133, %v134
    %v454 = vcombine.high %v133, %v134
    %v455 = vcombine.low %v135, %v136
    %v456 = vcombine.high %v135, %v136
    %v458 = vunpack.c.l.s4 1983009808
    %v459 = vunpack.c.0.s8 %v458
    %v460 = vlaneseq
    %v461 = vshrl.u32 %v460, 7
    %v462 = vsub.s32 %v459, %v461
    %v463 = vrot.slane %v453, %v462
    %v465 = vunpack.c.l.s4 1983009808
    %v466 = vunpack.c.0.s8 %v465
    %v467 = vlaneseq
    %v468 = vshrl.u32 %v467, 7
    %v469 = vsub.s32 %v466, %v468
    %v470 = vrot.slane %v454, %v469
    %v472 = vunpack.c.l.s4 1983009808
    %v473 = vunpack.c.0.s8 %v472
    %v474 = vlaneseq
    %v475 = vshrl.u32 %v474, 7
    %v476 = vsub.s32 %v473, %v475
    %v477 = vrot.slane %v455, %v476
    %v479 = vunpack.c.l.s4 1983009808
    %v480 = vunpack.c.0.s8 %v479
    %v481 = vlaneseq
    %v482 = vshrl.u32 %v481, 7
    %v483 = vsub.s32 %v480, %v482
    %v484 = vrot.slane %v456, %v483
    %v485 = vcombine.low %v463, %v477
    %v486 = vcombine.high %v463, %v477
    %v487 = vcombine.low %v470, %v484
    %v488 = vcombine.high %v470, %v484
    %v489 = vcombine.low %v137, %v138
    %v490 = vcombine.high %v137, %v138
    %v491 = vcombine.low %v139, %v140
    %v492 = vcombine.high %v139, %v140
    %v494 = vunpack.c.l.s4 1983009808
    %v495 = vunpack.c.0.s8 %v494
    %v496 = vlaneseq
    %v497 = vshrl.u32 %v496, 7
    %v498 = vsub.s32 %v495, %v497
    %v499 = vrot.slane %v489, %v498
    %v501 = vunpack.c.l.s4 1983009808
    %v502 = vunpack.c.0.s8 %v501
    %v503 = vlaneseq
    %v504 = vshrl.u32 %v503, 7
    %v505 = vsub.s32 %v502, %v504
    %v506 = vrot.slane %v490, %v505
    %v508 = vunpack.c.l.s4 1983009808
    %v509 = vunpack.c.0.s8 %v508
    %v510 = vlaneseq
    %v511 = vshrl.u32 %v510, 7
    %v512 = vsub.s32 %v509, %v511
    %v513 = vrot.slane %v491, %v512
    %v515 = vunpack.c.l.s4 1983009808
    %v516 = vunpack.c.0.s8 %v515
    %v517 = vlaneseq
    %v518 = vshrl.u32 %v517, 7
    %v519 = vsub.s32 %v516, %v518
    %v520 = vrot.slane %v492, %v519
    %v521 = vcombine.low %v499, %v513
    %v522 = vcombine.high %v499, %v513
    %v523 = vcombine.low %v506, %v520
    %v524 = vcombine.high %v506, %v520
    %v525 = vcombine.low %v141, %v142
    %v526 = vcombine.high %v141, %v142
    %v527 = vcombine.low %v143, %v144
    %v528 = vcombine.high %v143, %v144
    %v530 = vunpack.c.l.s4 1983009808
    %v531 = vunpack.c.0.s8 %v530
    %v532 = vlaneseq
    %v533 = vshrl.u32 %v532, 7
    %v534 = vsub.s32 %v531, %v533
    %v535 = vrot.slane %v525, %v534
    %v537 = vunpack.c.l.s4 1983009808
    %v538 = vunpack.c.0.s8 %v537
    %v539 = vlaneseq
    %v540 = vshrl.u32 %v539, 7
    %v541 = vsub.s32 %v538, %v540
    %v542 = vrot.slane %v526, %v541
    %v544 = vunpack.c.l.s4 1983009808
    %v545 = vunpack.c.0.s8 %v544
    %v546 = vlaneseq
    %v547 = vshrl.u32 %v546, 7
    %v548 = vsub.s32 %v545, %v547
    %v549 = vrot.slane %v527, %v548
    %v551 = vunpack.c.l.s4 1983009808
    %v552 = vunpack.c.0.s8 %v551
    %v553 = vlaneseq
    %v554 = vshrl.u32 %v553, 7
    %v555 = vsub.s32 %v552, %v554
    %v556 = vrot.slane %v528, %v555
    %v557 = vcombine.low %v535, %v549
    %v558 = vcombine.high %v535, %v549
    %v559 = vcombine.low %v542, %v556
    %v560 = vcombine.high %v542, %v556
    %v561 = vcombine.low %v145, %v146
    %v562 = vcombine.high %v145, %v146
    %v563 = vcombine.low %v147, %v148
    %v564 = vcombine.high %v147, %v148
    %v566 = vunpack.c.l.s4 1983009808
    %v567 = vunpack.c.0.s8 %v566
    %v568 = vlaneseq
    %v569 = vshrl.u32 %v568, 7
    %v570 = vsub.s32 %v567, %v569
    %v571 = vrot.slane %v561, %v570
    %v573 = vunpack.c.l.s4 1983009808
    %v574 = vunpack.c.0.s8 %v573
    %v575 = vlaneseq
    %v576 = vshrl.u32 %v575, 7
    %v577 = vsub.s32 %v574, %v576
    %v578 = vrot.slane %v562, %v577
    %v580 = vunpack.c.l.s4 1983009808
    %v581 = vunpack.c.0.s8 %v580
    %v582 = vlaneseq
    %v583 = vshrl.u32 %v582, 7
    %v584 = vsub.s32 %v581, %v583
    %v585 = vrot.slane %v563, %v584
    %v587 = vunpack.c.l.s4 1983009808
    %v588 = vunpack.c.0.s8 %v587
    %v589 = vlaneseq
    %v590 = vshrl.u32 %v589, 7
    %v591 = vsub.s32 %v588, %v590
    %v592 = vrot.slane %v564, %v591
    %v593 = vcombine.low %v571, %v585
    %v594 = vcombine.high %v571, %v585
    %v595 = vcombine.low %v578, %v592
    %v596 = vcombine.high %v578, %v592
    %v597 = vcombine.low %v149, %v150
    %v598 = vcombine.high %v149, %v150
    %v599 = vcombine.low %v151, %v152
    %v600 = vcombine.high %v151, %v152
    %v602 = vunpack.c.l.s4 1983009808
    %v603 = vunpack.c.0.s8 %v602
    %v604 = vlaneseq
    %v605 = vshrl.u32 %v604, 7
    %v606 = vsub.s32 %v603, %v605
    %v607 = vrot.slane %v597, %v606
    %v609 = vunpack.c.l.s4 1983009808
    %v610 = vunpack.c.0.s8 %v609
    %v611 = vlaneseq
    %v612 = vshrl.u32 %v611, 7
    %v613 = vsub.s32 %v610, %v612
    %v614 = vrot.slane %v598, %v613
    %v616 = vunpack.c.l.s4 1983009808
    %v617 = vunpack.c.0.s8 %v616
    %v618 = vlaneseq
    %v619 = vshrl.u32 %v618, 7
    %v620 = vsub.s32 %v617, %v619
    %v621 = vrot.slane %v599, %v620
    %v623 = vunpack.c.l.s4 1983009808
    %v624 = vunpack.c.0.s8 %v623
    %v625 = vlaneseq
    %v626 = vshrl.u32 %v625, 7
    %v627 = vsub.s32 %v624, %v626
    %v628 = vrot.slane %v600, %v627
    %v629 = vcombine.low %v607, %v621
    %v630 = vcombine.high %v607, %v621
    %v631 = vcombine.low %v614, %v628
    %v632 = vcombine.high %v614, %v628
    %v633 = vcombine.low %v153, %v154
    %v634 = vcombine.high %v153, %v154
    %v635 = vcombine.low %v155, %v156
    %v636 = vcombine.high %v155, %v156
    %v638 = vunpack.c.l.s4 1983009808
    %v639 = vunpack.c.0.s8 %v638
    %v640 = vlaneseq
    %v641 = vshrl.u32 %v640, 7
    %v642 = vsub.s32 %v639, %v641
    %v643 = vrot.slane %v633, %v642
    %v645 = vunpack.c.l.s4 1983009808
    %v646 = vunpack.c.0.s8 %v645
    %v647 = vlaneseq
    %v648 = vshrl.u32 %v647, 7
    %v649 = vsub.s32 %v646, %v648
    %v650 = vrot.slane %v634, %v649
    %v652 = vunpack.c.l.s4 1983009808
    %v653 = vunpack.c.0.s8 %v652
    %v654 = vlaneseq
    %v655 = vshrl.u32 %v654, 7
    %v656 = vsub.s32 %v653, %v655
    %v657 = vrot.slane %v635, %v656
    %v659 = vunpack.c.l.s4 1983009808
    %v660 = vunpack.c.0.s8 %v659
    %v661 = vlaneseq
    %v662 = vshrl.u32 %v661, 7
    %v663 = vsub.s32 %v660, %v662
    %v664 = vrot.slane %v636, %v663
    %v665 = vcombine.low %v643, %v657
    %v666 = vcombine.high %v643, %v657
    %v667 = vcombine.low %v650, %v664
    %v668 = vcombine.high %v650, %v664
    %v669 = vcombine.low %v157, %v158
    %v670 = vcombine.high %v157, %v158
    %v671 = vcombine.low %v159, %v160
    %v672 = vcombine.high %v159, %v160
    %v674 = vunpack.c.l.s4 1983009808
    %v675 = vunpack.c.0.s8 %v674
    %v676 = vlaneseq
    %v677 = vshrl.u32 %v676, 7
    %v678 = vsub.s32 %v675, %v677
    %v679 = vrot.slane %v669, %v678
    %v681 = vunpack.c.l.s4 1983009808
    %v682 = vunpack.c.0.s8 %v681
    %v683 = vlaneseq
    %v684 = vshrl.u32 %v683, 7
    %v685 = vsub.s32 %v682, %v684
    %v686 = vrot.slane %v670, %v685
    %v688 = vunpack.c.l.s4 1983009808
    %v689 = vunpack.c.0.s8 %v688
    %v690 = vlaneseq
    %v691 = vshrl.u32 %v690, 7
    %v692 = vsub.s32 %v689, %v691
    %v693 = vrot.slane %v671, %v692
    %v695 = vunpack.c.l.s4 1983009808
    %v696 = vunpack.c.0.s8 %v695
    %v697 = vlaneseq
    %v698 = vshrl.u32 %v697, 7
    %v699 = vsub.s32 %v696, %v698
    %v700 = vrot.slane %v672, %v699
    %v701 = vcombine.low %v679, %v693
    %v702 = vcombine.high %v679, %v693
    %v703 = vcombine.low %v686, %v700
    %v704 = vcombine.high %v686, %v700
    %v705 = vcombine.low %v161, %v162
    %v706 = vcombine.high %v161, %v162
    %v707 = vcombine.low %v163, %v164
    %v708 = vcombine.high %v163, %v164
    %v710 = vunpack.c.l.s4 1983009808
    %v711 = vunpack.c.0.s8 %v710
    %v712 = vlaneseq
    %v713 = vshrl.u32 %v712, 7
    %v714 = vsub.s32 %v711, %v713
    %v715 = vrot.slane %v705, %v714
    %v717 = vunpack.c.l.s4 1983009808
    %v718 = vunpack.c.0.s8 %v717
    %v719 = vlaneseq
    %v720 = vshrl.u32 %v719, 7
    %v721 = vsub.s32 %v718, %v720
    %v722 = vrot.slane %v706, %v721
    %v724 = vunpack.c.l.s4 1983009808
    %v725 = vunpack.c.0.s8 %v724
    %v726 = vlaneseq
    %v727 = vshrl.u32 %v726, 7
    %v728 = vsub.s32 %v725, %v727
    %v729 = vrot.slane %v707, %v728
    %v731 = vunpack.c.l.s4 1983009808
    %v732 = vunpack.c.0.s8 %v731
    %v733 = vlaneseq
    %v734 = vshrl.u32 %v733, 7
    %v735 = vsub.s32 %v732, %v734
    %v736 = vrot.slane %v708, %v735
    %v737 = vcombine.low %v715, %v729
    %v738 = vcombine.high %v715, %v729
    %v739 = vcombine.low %v722, %v736
    %v740 = vcombine.high %v722, %v736
    %v741 = vcombine.low %v165, %v166
    %v742 = vcombine.high %v165, %v166
    %v743 = vcombine.low %v167, %v168
    %v744 = vcombine.high %v167, %v168
    %v746 = vunpack.c.l.s4 1983009808
    %v747 = vunpack.c.0.s8 %v746
    %v748 = vlaneseq
    %v749 = vshrl.u32 %v748, 7
    %v750 = vsub.s32 %v747, %v749
    %v751 = vrot.slane %v741, %v750
    %v753 = vunpack.c.l.s4 1983009808
    %v754 = vunpack.c.0.s8 %v753
    %v755 = vlaneseq
    %v756 = vshrl.u32 %v755, 7
    %v757 = vsub.s32 %v754, %v756
    %v758 = vrot.slane %v742, %v757
    %v760 = vunpack.c.l.s4 1983009808
    %v761 = vunpack.c.0.s8 %v760
    %v762 = vlaneseq
    %v763 = vshrl.u32 %v762, 7
    %v764 = vsub.s32 %v761, %v763
    %v765 = vrot.slane %v743, %v764
    %v767 = vunpack.c.l.s4 1983009808
    %v768 = vunpack.c.0.s8 %v767
    %v769 = vlaneseq
    %v770 = vshrl.u32 %v769, 7
    %v771 = vsub.s32 %v768, %v770
    %v772 = vrot.slane %v744, %v771
    %v773 = vcombine.low %v751, %v765
    %v774 = vcombine.high %v751, %v765
    %v775 = vcombine.low %v758, %v772
    %v776 = vcombine.high %v758, %v772
    %v777 = vcombine.low %v169, %v170
    %v778 = vcombine.high %v169, %v170
    %v779 = vcombine.low %v171, %v172
    %v780 = vcombine.high %v171, %v172
    %v782 = vunpack.c.l.s4 1983009808
    %v783 = vunpack.c.0.s8 %v782
    %v784 = vlaneseq
    %v785 = vshrl.u32 %v784, 7
    %v786 = vsub.s32 %v783, %v785
    %v787 = vrot.slane %v777, %v786
    %v789 = vunpack.c.l.s4 1983009808
    %v790 = vunpack.c.0.s8 %v789
    %v791 = vlaneseq
    %v792 = vshrl.u32 %v791, 7
    %v793 = vsub.s32 %v790, %v792
    %v794 = vrot.slane %v778, %v793
    %v796 = vunpack.c.l.s4 1983009808
    %v797 = vunpack.c.0.s8 %v796
    %v798 = vlaneseq
    %v799 = vshrl.u32 %v798, 7
    %v800 = vsub.s32 %v797, %v799
    %v801 = vrot.slane %v779, %v800
    %v803 = vunpack.c.l.s4 1983009808
    %v804 = vunpack.c.0.s8 %v803
    %v805 = vlaneseq
    %v806 = vshrl.u32 %v805, 7
    %v807 = vsub.s32 %v804, %v806
    %v808 = vrot.slane %v780, %v807
    %v809 = vcombine.low %v787, %v801
    %v810 = vcombine.high %v787, %v801
    %v811 = vcombine.low %v794, %v808
    %v812 = vcombine.high %v794, %v808
    %v877 = vpack.c.bf16 %v305, %v269
    %v878 = vpack.c.bf16 %v306, %v270
    %v879 = vpack.c.bf16 %v307, %v271
    %v880 = vpack.c.bf16 %v308, %v272
    %v881 = vpack.c.bf16 %v377, %v341
    %v882 = vpack.c.bf16 %v378, %v342
    %v883 = vpack.c.bf16 %v379, %v343
    %v884 = vpack.c.bf16 %v380, %v344
    %v885 = vpack.c.bf16 %v449, %v413
    %v886 = vpack.c.bf16 %v450, %v414
    %v887 = vpack.c.bf16 %v451, %v415
    %v888 = vpack.c.bf16 %v452, %v416
    %v889 = vpack.c.bf16 %v521, %v485
    %v890 = vpack.c.bf16 %v522, %v486
    %v891 = vpack.c.bf16 %v523, %v487
    %v892 = vpack.c.bf16 %v524, %v488
    %v893 = vpack.c.bf16 %v593, %v557
    %v894 = vpack.c.bf16 %v594, %v558
    %v895 = vpack.c.bf16 %v595, %v559
    %v896 = vpack.c.bf16 %v596, %v560
    %v897 = vpack.c.bf16 %v665, %v629
    %v898 = vpack.c.bf16 %v666, %v630
    %v899 = vpack.c.bf16 %v667, %v631
    %v900 = vpack.c.bf16 %v668, %v632
    %v901 = vpack.c.bf16 %v737, %v701
    %v902 = vpack.c.bf16 %v738, %v702
    %v903 = vpack.c.bf16 %v739, %v703
    %v904 = vpack.c.bf16 %v740, %v704
    %v905 = vpack.c.bf16 %v809, %v773
    %v906 = vpack.c.bf16 %v810, %v774
    %v907 = vpack.c.bf16 %v811, %v775
    %v908 = vpack.c.bf16 %v812, %v776
    %v909 = vld [vmem:[#allocation5] sm:$0xff]
    %v910 = vld [vmem:[#allocation5 + $0x8] sm:$0xff]
    %v911 = vld [vmem:[#allocation5 + $0x10] sm:$0xff]
    %v912 = vld [vmem:[#allocation5 + $0x18] sm:$0xff]
    %v913 = vld [vmem:[#allocation5 + $0x20] sm:$0xff]
    %v914 = vld [vmem:[#allocation5 + $0x28] sm:$0xff]
    %v915 = vld [vmem:[#allocation5 + $0x30] sm:$0xff]
    %v916 = vld [vmem:[#allocation5 + $0x38] sm:$0xff]
    %v917 = vld [vmem:[#allocation5 + $0x40] sm:$0xff]
    %v918 = vld [vmem:[#allocation5 + $0x48] sm:$0xff]
    %v919 = vld [vmem:[#allocation5 + $0x50] sm:$0xff]
    %v920 = vld [vmem:[#allocation5 + $0x58] sm:$0xff]
    %v921 = vld [vmem:[#allocation5 + $0x60] sm:$0xff]
    %v922 = vld [vmem:[#allocation5 + $0x68] sm:$0xff]
    %v923 = vld [vmem:[#allocation5 + $0x70] sm:$0xff]
    %v924 = vld [vmem:[#allocation5 + $0x78] sm:$0xff]
    %v925 = vld [vmem:[#allocation5 + $0x80] sm:$0xff]
    %v926 = vld [vmem:[#allocation5 + $0x88] sm:$0xff]
    %v927 = vld [vmem:[#allocation5 + $0x90] sm:$0xff]
    %v928 = vld [vmem:[#allocation5 + $0x98] sm:$0xff]
    %v929 = vld [vmem:[#allocation5 + $0xa0] sm:$0xff]
    %v930 = vld [vmem:[#allocation5 + $0xa8] sm:$0xff]
    %v931 = vld [vmem:[#allocation5 + $0xb0] sm:$0xff]
    %v932 = vld [vmem:[#allocation5 + $0xb8] sm:$0xff]
    %v933 = vld [vmem:[#allocation5 + $0xc0] sm:$0xff]
    %v934 = vld [vmem:[#allocation5 + $0xc8] sm:$0xff]
    %v935 = vld [vmem:[#allocation5 + $0xd0] sm:$0xff]
    %v936 = vld [vmem:[#allocation5 + $0xd8] sm:$0xff]
    %v937 = vld [vmem:[#allocation5 + $0xe0] sm:$0xff]
    %v938 = vld [vmem:[#allocation5 + $0xe8] sm:$0xff]
    %v939 = vld [vmem:[#allocation5 + $0xf0] sm:$0xff]
    %v940 = vld [vmem:[#allocation5 + $0xf8] sm:$0xff]
    %v941 = vld [vmem:[#allocation5 + $0x100] sm:$0xff]
    %v942 = vld [vmem:[#allocation5 + $0x108] sm:$0xff]
    %v943 = vld [vmem:[#allocation5 + $0x110] sm:$0xff]
    %v944 = vld [vmem:[#allocation5 + $0x118] sm:$0xff]
    %v945 = vld [vmem:[#allocation5 + $0x120] sm:$0xff]
    %v946 = vld [vmem:[#allocation5 + $0x128] sm:$0xff]
    %v947 = vld [vmem:[#allocation5 + $0x130] sm:$0xff]
    %v948 = vld [vmem:[#allocation5 + $0x138] sm:$0xff]
    %v949 = vld [vmem:[#allocation5 + $0x140] sm:$0xff]
    %v950 = vld [vmem:[#allocation5 + $0x148] sm:$0xff]
    %v951 = vld [vmem:[#allocation5 + $0x150] sm:$0xff]
    %v952 = vld [vmem:[#allocation5 + $0x158] sm:$0xff]
    %v953 = vld [vmem:[#allocation5 + $0x160] sm:$0xff]
    %v954 = vld [vmem:[#allocation5 + $0x168] sm:$0xff]
    %v955 = vld [vmem:[#allocation5 + $0x170] sm:$0xff]
    %v956 = vld [vmem:[#allocation5 + $0x178] sm:$0xff]
    %v957 = vld [vmem:[#allocation5 + $0x180] sm:$0xff]
    %v958 = vld [vmem:[#allocation5 + $0x188] sm:$0xff]
    %v959 = vld [vmem:[#allocation5 + $0x190] sm:$0xff]
    %v960 = vld [vmem:[#allocation5 + $0x198] sm:$0xff]
    %v961 = vld [vmem:[#allocation5 + $0x1a0] sm:$0xff]
    %v962 = vld [vmem:[#allocation5 + $0x1a8] sm:$0xff]
    %v963 = vld [vmem:[#allocation5 + $0x1b0] sm:$0xff]
    %v964 = vld [vmem:[#allocation5 + $0x1b8] sm:$0xff]
    %v965 = vld [vmem:[#allocation5 + $0x1c0] sm:$0xff]
    %v966 = vld [vmem:[#allocation5 + $0x1c8] sm:$0xff]
    %v967 = vld [vmem:[#allocation5 + $0x1d0] sm:$0xff]
    %v968 = vld [vmem:[#allocation5 + $0x1d8] sm:$0xff]
    %v969 = vld [vmem:[#allocation5 + $0x1e0] sm:$0xff]
    %v970 = vld [vmem:[#allocation5 + $0x1e8] sm:$0xff]
    %v971 = vld [vmem:[#allocation5 + $0x1f0] sm:$0x11]
    %v972 = vld [vmem:[%s2] sm:$0x3]
    %v974 = vlaneseq
    %v975 = vshrl.u32 %v974, 7
    %v976 = vsub.s32 0, %v975
    %v977 = vrot.slane %v972, %v976
    %v978 = vlaneseq
    %v979 = vshrl.u32 %v978, 7
    %v980 = vsub.s32 1, %v979
    %v981 = vrot.slane %v972, %v980
    %v1047 = vunpack.c.l.b16 %v909
    %v1048 = vunpack.c.h.b16 %v909
    %v1049 = vunpack.c.l.b16 %v910
    %v1050 = vunpack.c.h.b16 %v910
    %v1051 = vunpack.c.l.b16 %v911
    %v1052 = vunpack.c.h.b16 %v911
    %v1053 = vunpack.c.l.b16 %v912
    %v1054 = vunpack.c.h.b16 %v912
    %v1055 = vunpack.c.l.b16 %v913
    %v1056 = vunpack.c.h.b16 %v913
    %v1057 = vunpack.c.l.b16 %v914
    %v1058 = vunpack.c.h.b16 %v914
    %v1059 = vunpack.c.l.b16 %v915
    %v1060 = vunpack.c.h.b16 %v915
    %v1061 = vunpack.c.l.b16 %v916
    %v1062 = vunpack.c.h.b16 %v916
    %v1063 = vunpack.c.l.b16 %v917
    %v1064 = vunpack.c.h.b16 %v917
    %v1065 = vunpack.c.l.b16 %v918
    %v1066 = vunpack.c.h.b16 %v918
    %v1067 = vunpack.c.l.b16 %v919
    %v1068 = vunpack.c.h.b16 %v919
    %v1069 = vunpack.c.l.b16 %v920
    %v1070 = vunpack.c.h.b16 %v920
    %v1071 = vunpack.c.l.b16 %v921
    %v1072 = vunpack.c.h.b16 %v921
    %v1073 = vunpack.c.l.b16 %v922
    %v1074 = vunpack.c.h.b16 %v922
    %v1075 = vunpack.c.l.b16 %v923
    %v1076 = vunpack.c.h.b16 %v923
    %v1077 = vunpack.c.l.b16 %v924
    %v1078 = vunpack.c.h.b16 %v924
    %v1079 = vunpack.c.l.b16 %v925
    %v1080 = vunpack.c.h.b16 %v925
    %v1081 = vunpack.c.l.b16 %v926
    %v1082 = vunpack.c.h.b16 %v926
    %v1083 = vunpack.c.l.b16 %v927
    %v1084 = vunpack.c.h.b16 %v927
    %v1085 = vunpack.c.l.b16 %v928
    %v1086 = vunpack.c.h.b16 %v928
    %v1087 = vunpack.c.l.b16 %v929
    %v1088 = vunpack.c.h.b16 %v929
    %v1089 = vunpack.c.l.b16 %v930
    %v1090 = vunpack.c.h.b16 %v930
    %v1091 = vunpack.c.l.b16 %v931
    %v1092 = vunpack.c.h.b16 %v931
    %v1093 = vunpack.c.l.b16 %v932
    %v1094 = vunpack.c.h.b16 %v932
    %v1095 = vunpack.c.l.b16 %v933
    %v1096 = vunpack.c.h.b16 %v933
    %v1097 = vunpack.c.l.b16 %v934
    %v1098 = vunpack.c.h.b16 %v934
    %v1099 = vunpack.c.l.b16 %v935
    %v1100 = vunpack.c.h.b16 %v935
    %v1101 = vunpack.c.l.b16 %v936
    %v1102 = vunpack.c.h.b16 %v936
    %v1103 = vunpack.c.l.b16 %v937
    %v1104 = vunpack.c.h.b16 %v937
    %v1105 = vunpack.c.l.b16 %v938
    %v1106 = vunpack.c.h.b16 %v938
    %v1107 = vunpack.c.l.b16 %v939
    %v1108 = vunpack.c.h.b16 %v939
    %v1109 = vunpack.c.l.b16 %v940
    %v1110 = vunpack.c.h.b16 %v940
    %v1111 = vunpack.c.l.b16 %v941
    %v1112 = vunpack.c.h.b16 %v941
    %v1113 = vunpack.c.l.b16 %v942
    %v1114 = vunpack.c.h.b16 %v942
    %v1115 = vunpack.c.l.b16 %v943
    %v1116 = vunpack.c.h.b16 %v943
    %v1117 = vunpack.c.l.b16 %v944
    %v1118 = vunpack.c.h.b16 %v944
    %v1119 = vunpack.c.l.b16 %v945
    %v1120 = vunpack.c.h.b16 %v945
    %v1121 = vunpack.c.l.b16 %v946
    %v1122 = vunpack.c.h.b16 %v946
    %v1123 = vunpack.c.l.b16 %v947
    %v1124 = vunpack.c.h.b16 %v947
    %v1125 = vunpack.c.l.b16 %v948
    %v1126 = vunpack.c.h.b16 %v948
    %v1127 = vunpack.c.l.b16 %v949
    %v1128 = vunpack.c.h.b16 %v949
    %v1129 = vunpack.c.l.b16 %v950
    %v1130 = vunpack.c.h.b16 %v950
    %v1131 = vunpack.c.l.b16 %v951
    %v1132 = vunpack.c.h.b16 %v951
    %v1133 = vunpack.c.l.b16 %v952
    %v1134 = vunpack.c.h.b16 %v952
    %v1135 = vunpack.c.l.b16 %v953
    %v1136 = vunpack.c.h.b16 %v953
    %v1137 = vunpack.c.l.b16 %v954
    %v1138 = vunpack.c.h.b16 %v954
    %v1139 = vunpack.c.l.b16 %v955
    %v1140 = vunpack.c.h.b16 %v955
    %v1141 = vunpack.c.l.b16 %v956
    %v1142 = vunpack.c.h.b16 %v956
    %v1143 = vunpack.c.l.b16 %v957
    %v1144 = vunpack.c.h.b16 %v957
    %v1145 = vunpack.c.l.b16 %v958
    %v1146 = vunpack.c.h.b16 %v958
    %v1147 = vunpack.c.l.b16 %v959
    %v1148 = vunpack.c.h.b16 %v959
    %v1149 = vunpack.c.l.b16 %v960
    %v1150 = vunpack.c.h.b16 %v960
    %v1151 = vunpack.c.l.b16 %v961
    %v1152 = vunpack.c.h.b16 %v961
    %v1153 = vunpack.c.l.b16 %v962
    %v1154 = vunpack.c.h.b16 %v962
    %v1155 = vunpack.c.l.b16 %v963
    %v1156 = vunpack.c.h.b16 %v963
    %v1157 = vunpack.c.l.b16 %v964
    %v1158 = vunpack.c.h.b16 %v964
    %v1159 = vunpack.c.l.b16 %v965
    %v1160 = vunpack.c.h.b16 %v965
    %v1161 = vunpack.c.l.b16 %v966
    %v1162 = vunpack.c.h.b16 %v966
    %v1163 = vunpack.c.l.b16 %v967
    %v1164 = vunpack.c.h.b16 %v967
    %v1165 = vunpack.c.l.b16 %v968
    %v1166 = vunpack.c.h.b16 %v968
    %v1167 = vunpack.c.l.b16 %v969
    %v1168 = vunpack.c.h.b16 %v969
    %v1169 = vunpack.c.l.b16 %v970
    %v1170 = vunpack.c.h.b16 %v970
    %v1171 = vunpack.c.l.b16 %v971
    %v1172 = vunpack.c.h.b16 %v971
    %v1173 = vpack.c.b16 %v1049, %v1047
    %v1174 = vpack.c.b16 %v1050, %v1048
    %v1175 = vpack.c.b16 %v1053, %v1051
    %v1176 = vpack.c.b16 %v1054, %v1052
    %v1177 = vpack.c.b16 %v1057, %v1055
    %v1178 = vpack.c.b16 %v1058, %v1056
    %v1179 = vpack.c.b16 %v1061, %v1059
    %v1180 = vpack.c.b16 %v1062, %v1060
    %v1181 = vpack.c.b16 %v1065, %v1063
    %v1182 = vpack.c.b16 %v1066, %v1064
    %v1183 = vpack.c.b16 %v1069, %v1067
    %v1184 = vpack.c.b16 %v1070, %v1068
    %v1185 = vpack.c.b16 %v1073, %v1071
    %v1186 = vpack.c.b16 %v1074, %v1072
    %v1187 = vpack.c.b16 %v1077, %v1075
    %v1188 = vpack.c.b16 %v1078, %v1076
    %v1189 = vpack.c.b16 %v1081, %v1079
    %v1190 = vpack.c.b16 %v1082, %v1080
    %v1191 = vpack.c.b16 %v1085, %v1083
    %v1192 = vpack.c.b16 %v1086, %v1084
    %v1193 = vpack.c.b16 %v1089, %v1087
    %v1194 = vpack.c.b16 %v1090, %v1088
    %v1195 = vpack.c.b16 %v1093, %v1091
    %v1196 = vpack.c.b16 %v1094, %v1092
    %v1197 = vpack.c.b16 %v1097, %v1095
    %v1198 = vpack.c.b16 %v1098, %v1096
    %v1199 = vpack.c.b16 %v1101, %v1099
    %v1200 = vpack.c.b16 %v1102, %v1100
    %v1201 = vpack.c.b16 %v1105, %v1103
    %v1202 = vpack.c.b16 %v1106, %v1104
    %v1203 = vpack.c.b16 %v1109, %v1107
    %v1204 = vpack.c.b16 %v1110, %v1108
    %v1205 = vpack.c.b16 %v1113, %v1111
    %v1206 = vpack.c.b16 %v1114, %v1112
    %v1207 = vpack.c.b16 %v1117, %v1115
    %v1208 = vpack.c.b16 %v1118, %v1116
    %v1209 = vpack.c.b16 %v1121, %v1119
    %v1210 = vpack.c.b16 %v1122, %v1120
    %v1211 = vpack.c.b16 %v1125, %v1123
    %v1212 = vpack.c.b16 %v1126, %v1124
    %v1213 = vpack.c.b16 %v1129, %v1127
    %v1214 = vpack.c.b16 %v1130, %v1128
    %v1215 = vpack.c.b16 %v1133, %v1131
    %v1216 = vpack.c.b16 %v1134, %v1132
    %v1217 = vpack.c.b16 %v1137, %v1135
    %v1218 = vpack.c.b16 %v1138, %v1136
    %v1219 = vpack.c.b16 %v1141, %v1139
    %v1220 = vpack.c.b16 %v1142, %v1140
    %v1221 = vpack.c.b16 %v1145, %v1143
    %v1222 = vpack.c.b16 %v1146, %v1144
    %v1223 = vpack.c.b16 %v1149, %v1147
    %v1224 = vpack.c.b16 %v1150, %v1148
    %v1225 = vpack.c.b16 %v1153, %v1151
    %v1226 = vpack.c.b16 %v1154, %v1152
    %v1227 = vpack.c.b16 %v1157, %v1155
    %v1228 = vpack.c.b16 %v1158, %v1156
    %v1229 = vpack.c.b16 %v1161, %v1159
    %v1230 = vpack.c.b16 %v1162, %v1160
    %v1231 = vpack.c.b16 %v1165, %v1163
    %v1232 = vpack.c.b16 %v1166, %v1164
    %v1233 = vpack.c.b16 %v1169, %v1167
    %v1234 = vpack.c.b16 %v1170, %v1168
    %v1235 = vpack.c.b16 %v1171, %v1171
    %v1236 = vpack.c.b16 %v1172, %v1172
    %vm1299 = vcmask 924672
    %v1301 = vsel %vm1299, %v880, 0
    %v1304 = vsel %vm1299, %v884, 0
    %v1307 = vsel %vm1299, %v888, 0
    %v1310 = vsel %vm1299, %v892, 0
    %v1313 = vsel %vm1299, %v896, 0
    %v1316 = vsel %vm1299, %v900, 0
    %v1319 = vsel %vm1299, %v904, 0
    %v1322 = vsel %vm1299, %v908, 0
    %vm1324 = vcmask 1040384
    %v1325 = vsel 0, 4294967295, 65535
    %v1326 = vsel %vm1324, %v1325, 0
    %v1328 = vand.u32 %v1235, %v1326
    %v1331 = vand.u32 %v1236, %v1326
    %1333 = vmatprep.subr.bf16.mxu0 %v1188
    %1334 = vmatpush1.bf16.msra.mxu0 %v1187
    %1335 = vmatprep.subr.bf16.mxu0 %v1186
    %1336 = vmatpush1.bf16.msra.mxu0 %v1185
    %1337 = vmatprep.subr.bf16.mxu0 %v1184
    %1338 = vmatpush1.bf16.msra.mxu0 %v1183
    %1339 = vmatprep.subr.bf16.mxu0 %v1182
    %1340 = vmatpush1.bf16.msra.mxu0 %v1181
    %1341 = vmatprep.subr.bf16.mxu0 %v1180
    %1342 = vmatpush1.bf16.msra.mxu0 %v1179
    %1343 = vmatprep.subr.bf16.mxu0 %v1178
    %1344 = vmatpush1.bf16.msra.mxu0 %v1177
    %1345 = vmatprep.subr.bf16.mxu0 %v1176
    %1346 = vmatpush1.bf16.msra.mxu0 %v1175
    %1347 = vmatprep.subr.bf16.mxu0 %v1174
    %1348 = vmatpush1.bf16.msra.mxu0 %v1173
    %1349 = vmatprep.subr.bf16.mxu0 %v1204
    %1350 = vmatpush2.bf16.msra.mxu0 %v1203
    %1351 = vmatprep.subr.bf16.mxu0 %v1202
    %1352 = vmatpush2.bf16.msra.mxu0 %v1201
    %1353 = vmatprep.subr.bf16.mxu0 %v1200
    %1354 = vmatpush2.bf16.msra.mxu0 %v1199
    %1355 = vmatprep.subr.bf16.mxu0 %v1198
    %1356 = vmatpush2.bf16.msra.mxu0 %v1197
    %1357 = vmatprep.subr.bf16.mxu0 %v1196
    %1358 = vmatpush2.bf16.msra.mxu0 %v1195
    %1359 = vmatprep.subr.bf16.mxu0 %v1194
    %1360 = vmatpush2.bf16.msra.mxu0 %v1193
    %1361 = vmatprep.subr.bf16.mxu0 %v1192
    %1362 = vmatpush2.bf16.msra.mxu0 %v1191
    %1363 = vmatprep.subr.bf16.mxu0 %v1190
    %1364 = vmatpush2.bf16.msra.mxu0 %v1189
    %1365 = vmatprep.mubr.bf16.mxu0 %v878
    %1366 = vmatmul.mubr.bf16.gmra.mxu0 %v877
    %v1367 = vpop.f32.mrf.mxu0
    %v1368 = vadd.f32 %v977, %v1367
    %v1369 = vpop.f32.mrf.mxu0
    %v1370 = vadd.f32 %v981, %v1369
    %v1371 = vpop.f32.mrf.mxu0
    %v1372 = vadd.f32 %v977, %v1371
    %v1373 = vpop.f32.mrf.mxu0
    %v1374 = vadd.f32 %v981, %v1373
    %1375 = vmatprep.mubr.bf16.mxu0 %v882
    %1376 = vmatmul.mubr.bf16.gmra.mxu0 %v881
    %v1377 = vpop.f32.mrf.mxu0
    %v1378 = vadd.f32 %v977, %v1377
    %v1379 = vpop.f32.mrf.mxu0
    %v1380 = vadd.f32 %v981, %v1379
    %v1381 = vpop.f32.mrf.mxu0
    %v1382 = vadd.f32 %v977, %v1381
    %v1383 = vpop.f32.mrf.mxu0
    %v1384 = vadd.f32 %v981, %v1383
    %1385 = vmatprep.mubr.bf16.mxu0 %v886
    %1386 = vmatmul.mubr.bf16.gmra.mxu0 %v885
    %v1387 = vpop.f32.mrf.mxu0
    %v1388 = vadd.f32 %v977, %v1387
    %v1389 = vpop.f32.mrf.mxu0
    %v1390 = vadd.f32 %v981, %v1389
    %v1391 = vpop.f32.mrf.mxu0
    %v1392 = vadd.f32 %v977, %v1391
    %v1393 = vpop.f32.mrf.mxu0
    %v1394 = vadd.f32 %v981, %v1393
    %1395 = vmatprep.mubr.bf16.mxu0 %v890
    %1396 = vmatmul.mubr.bf16.gmra.mxu0 %v889
    %v1397 = vpop.f32.mrf.mxu0
    %v1398 = vadd.f32 %v977, %v1397
    %v1399 = vpop.f32.mrf.mxu0
    %v1400 = vadd.f32 %v981, %v1399
    %v1401 = vpop.f32.mrf.mxu0
    %v1402 = vadd.f32 %v977, %v1401
    %v1403 = vpop.f32.mrf.mxu0
    %v1404 = vadd.f32 %v981, %v1403
    %1405 = vmatprep.mubr.bf16.mxu0 %v894
    %1406 = vmatmul.mubr.bf16.gmra.mxu0 %v893
    %v1407 = vpop.f32.mrf.mxu0
    %v1408 = vadd.f32 %v977, %v1407
    %v1409 = vpop.f32.mrf.mxu0
    %v1410 = vadd.f32 %v981, %v1409
    %v1411 = vpop.f32.mrf.mxu0
    %v1412 = vadd.f32 %v977, %v1411
    %v1413 = vpop.f32.mrf.mxu0
    %v1414 = vadd.f32 %v981, %v1413
    %1415 = vmatprep.mubr.bf16.mxu0 %v898
    %1416 = vmatmul.mubr.bf16.gmra.mxu0 %v897
    %v1417 = vpop.f32.mrf.mxu0
    %v1418 = vadd.f32 %v977, %v1417
    %v1419 = vpop.f32.mrf.mxu0
    %v1420 = vadd.f32 %v981, %v1419
    %v1421 = vpop.f32.mrf.mxu0
    %v1422 = vadd.f32 %v977, %v1421
    %v1423 = vpop.f32.mrf.mxu0
    %v1424 = vadd.f32 %v981, %v1423
    %1425 = vmatprep.mubr.bf16.mxu0 %v902
    %1426 = vmatmul.mubr.bf16.gmra.mxu0 %v901
    %v1427 = vpop.f32.mrf.mxu0
    %v1428 = vadd.f32 %v977, %v1427
    %v1429 = vpop.f32.mrf.mxu0
    %v1430 = vadd.f32 %v981, %v1429
    %v1431 = vpop.f32.mrf.mxu0
    %v1432 = vadd.f32 %v977, %v1431
    %v1433 = vpop.f32.mrf.mxu0
    %v1434 = vadd.f32 %v981, %v1433
    %1435 = vmatprep.mubr.bf16.mxu0 %v906
    %1436 = vmatmul.mubr.bf16.gmra.mxu0 %v905
    %v1437 = vpop.f32.mrf.mxu0
    %v1438 = vadd.f32 %v977, %v1437
    %v1439 = vpop.f32.mrf.mxu0
    %v1440 = vadd.f32 %v981, %v1439
    %v1441 = vpop.f32.mrf.mxu0
    %v1442 = vadd.f32 %v977, %v1441
    %v1443 = vpop.f32.mrf.mxu0
    %v1444 = vadd.f32 %v981, %v1443
    %1445 = vdwg.mxu0
    %1446 = vmatprep.subr.bf16.mxu0 %v1220
    %1447 = vmatpush1.bf16.msra.mxu0 %v1219
    %1448 = vmatprep.subr.bf16.mxu0 %v1218
    %1449 = vmatpush1.bf16.msra.mxu0 %v1217
    %1450 = vmatprep.subr.bf16.mxu0 %v1216
    %1451 = vmatpush1.bf16.msra.mxu0 %v1215
    %1452 = vmatprep.subr.bf16.mxu0 %v1214
    %1453 = vmatpush1.bf16.msra.mxu0 %v1213
    %1454 = vmatprep.subr.bf16.mxu0 %v1212
    %1455 = vmatpush1.bf16.msra.mxu0 %v1211
    %1456 = vmatprep.subr.bf16.mxu0 %v1210
    %1457 = vmatpush1.bf16.msra.mxu0 %v1209
    %1458 = vmatprep.subr.bf16.mxu0 %v1208
    %1459 = vmatpush1.bf16.msra.mxu0 %v1207
    %1460 = vmatprep.subr.bf16.mxu0 %v1206
    %1461 = vmatpush1.bf16.msra.mxu0 %v1205
    %1462 = vmatprep.subr.bf16.mxu0 %v1331
    %1463 = vmatpush2.bf16.msra.mxu0 %v1328
    %1464 = vmatprep.subr.bf16.mxu0 %v1234
    %1465 = vmatpush2.bf16.msra.mxu0 %v1233
    %1466 = vmatprep.subr.bf16.mxu0 %v1232
    %1467 = vmatpush2.bf16.msra.mxu0 %v1231
    %1468 = vmatprep.subr.bf16.mxu0 %v1230
    %1469 = vmatpush2.bf16.msra.mxu0 %v1229
    %1470 = vmatprep.subr.bf16.mxu0 %v1228
    %1471 = vmatpush2.bf16.msra.mxu0 %v1227
    %1472 = vmatprep.subr.bf16.mxu0 %v1226
    %1473 = vmatpush2.bf16.msra.mxu0 %v1225
    %1474 = vmatprep.subr.bf16.mxu0 %v1224
    %1475 = vmatpush2.bf16.msra.mxu0 %v1223
    %1476 = vmatprep.subr.bf16.mxu0 %v1222
    %1477 = vmatpush2.bf16.msra.mxu0 %v1221
    %1478 = vmatprep.mubr.bf16.mxu0 %v1301
    %1479 = vmatmul.mubr.bf16.gmra.mxu0 %v879
    %v1480 = vpop.f32.mrf.mxu0
    %v1481 = vadd.f32 %v1368, %v1480
    %v1482 = vpop.f32.mrf.mxu0
    %v1483 = vadd.f32 %v1370, %v1482
    %v1484 = vpop.f32.mrf.mxu0
    %v1485 = vadd.f32 %v1372, %v1484
    %v1486 = vpop.f32.mrf.mxu0
    %v1487 = vadd.f32 %v1374, %v1486
    %1488 = vmatprep.mubr.bf16.mxu0 %v1304
    %1489 = vmatmul.mubr.bf16.gmra.mxu0 %v883
    %v1490 = vpop.f32.mrf.mxu0
    %v1491 = vadd.f32 %v1378, %v1490
    %v1492 = vpop.f32.mrf.mxu0
    %v1493 = vadd.f32 %v1380, %v1492
    %v1494 = vpop.f32.mrf.mxu0
    %v1495 = vadd.f32 %v1382, %v1494
    %v1496 = vpop.f32.mrf.mxu0
    %v1497 = vadd.f32 %v1384, %v1496
    %1498 = vmatprep.mubr.bf16.mxu0 %v1307
    %1499 = vmatmul.mubr.bf16.gmra.mxu0 %v887
    %v1500 = vpop.f32.mrf.mxu0
    %v1501 = vadd.f32 %v1388, %v1500
    %v1502 = vpop.f32.mrf.mxu0
    %v1503 = vadd.f32 %v1390, %v1502
    %v1504 = vpop.f32.mrf.mxu0
    %v1505 = vadd.f32 %v1392, %v1504
    %v1506 = vpop.f32.mrf.mxu0
    %v1507 = vadd.f32 %v1394, %v1506
    %1508 = vmatprep.mubr.bf16.mxu0 %v1310
    %1509 = vmatmul.mubr.bf16.gmra.mxu0 %v891
    %v1510 = vpop.f32.mrf.mxu0
    %v1511 = vadd.f32 %v1398, %v1510
    %v1512 = vpop.f32.mrf.mxu0
    %v1513 = vadd.f32 %v1400, %v1512
    %v1514 = vpop.f32.mrf.mxu0
    %v1515 = vadd.f32 %v1402, %v1514
    %v1516 = vpop.f32.mrf.mxu0
    %v1517 = vadd.f32 %v1404, %v1516
    %1518 = vmatprep.mubr.bf16.mxu0 %v1313
    %1519 = vmatmul.mubr.bf16.gmra.mxu0 %v895
    %v1520 = vpop.f32.mrf.mxu0
    %v1521 = vadd.f32 %v1408, %v1520
    %v1522 = vpop.f32.mrf.mxu0
    %v1523 = vadd.f32 %v1410, %v1522
    %v1524 = vpop.f32.mrf.mxu0
    %v1525 = vadd.f32 %v1412, %v1524
    %v1526 = vpop.f32.mrf.mxu0
    %v1527 = vadd.f32 %v1414, %v1526
    %1528 = vmatprep.mubr.bf16.mxu0 %v1316
    %1529 = vmatmul.mubr.bf16.gmra.mxu0 %v899
    %v1530 = vpop.f32.mrf.mxu0
    %v1531 = vadd.f32 %v1418, %v1530
    %v1532 = vpop.f32.mrf.mxu0
    %v1533 = vadd.f32 %v1420, %v1532
    %v1534 = vpop.f32.mrf.mxu0
    %v1535 = vadd.f32 %v1422, %v1534
    %v1536 = vpop.f32.mrf.mxu0
    %v1537 = vadd.f32 %v1424, %v1536
    %1538 = vmatprep.mubr.bf16.mxu0 %v1319
    %1539 = vmatmul.mubr.bf16.gmra.mxu0 %v903
    %v1540 = vpop.f32.mrf.mxu0
    %v1541 = vadd.f32 %v1428, %v1540
    %v1542 = vpop.f32.mrf.mxu0
    %v1543 = vadd.f32 %v1430, %v1542
    %v1544 = vpop.f32.mrf.mxu0
    %v1545 = vadd.f32 %v1432, %v1544
    %v1546 = vpop.f32.mrf.mxu0
    %v1547 = vadd.f32 %v1434, %v1546
    %1548 = vmatprep.mubr.bf16.mxu0 %v1322
    %1549 = vmatmul.mubr.bf16.gmra.mxu0 %v907
    %v1550 = vpop.f32.mrf.mxu0
    %v1551 = vadd.f32 %v1438, %v1550
    %v1552 = vpop.f32.mrf.mxu0
    %v1553 = vadd.f32 %v1440, %v1552
    %v1554 = vpop.f32.mrf.mxu0
    %v1555 = vadd.f32 %v1442, %v1554
    %v1556 = vpop.f32.mrf.mxu0
    %v1557 = vadd.f32 %v1444, %v1556
    %1558 = vdwg.mxu0
    %v1559 = vmax.f32 %v1481, 0.0
    %v1560 = vmax.f32 %v1483, 0.0
    %v1561 = vmax.f32 %v1485, 0.0
    %v1562 = vmax.f32 %v1487, 0.0
    %v1563 = vmax.f32 %v1491, 0.0
    %v1564 = vmax.f32 %v1493, 0.0
    %v1565 = vmax.f32 %v1495, 0.0
    %v1566 = vmax.f32 %v1497, 0.0
    %v1567 = vmax.f32 %v1501, 0.0
    %v1568 = vmax.f32 %v1503, 0.0
    %v1569 = vmax.f32 %v1505, 0.0
    %v1570 = vmax.f32 %v1507, 0.0
    %v1571 = vmax.f32 %v1511, 0.0
    %v1572 = vmax.f32 %v1513, 0.0
    %v1573 = vmax.f32 %v1515, 0.0
    %v1574 = vmax.f32 %v1517, 0.0
    %v1575 = vmax.f32 %v1521, 0.0
    %v1576 = vmax.f32 %v1523, 0.0
    %v1577 = vmax.f32 %v1525, 0.0
    %v1578 = vmax.f32 %v1527, 0.0
    %v1579 = vmax.f32 %v1531, 0.0
    %v1580 = vmax.f32 %v1533, 0.0
    %v1581 = vmax.f32 %v1535, 0.0
    %v1582 = vmax.f32 %v1537, 0.0
    %v1583 = vmax.f32 %v1541, 0.0
    %v1584 = vmax.f32 %v1543, 0.0
    %v1585 = vmax.f32 %v1545, 0.0
    %v1586 = vmax.f32 %v1547, 0.0
    %v1587 = vmax.f32 %v1551, 0.0
    %v1588 = vmax.f32 %v1553, 0.0
    %v1589 = vmax.f32 %v1555, 0.0
    %v1590 = vmax.f32 %v1557, 0.0
    %v1591 = vpack.c.bf16 %v1561, %v1559
    %v1592 = vpack.c.bf16 %v1562, %v1560
    %v1593 = vpack.c.bf16 %v1565, %v1563
    %v1594 = vpack.c.bf16 %v1566, %v1564
    %v1595 = vpack.c.bf16 %v1569, %v1567
    %v1596 = vpack.c.bf16 %v1570, %v1568
    %v1597 = vpack.c.bf16 %v1573, %v1571
    %v1598 = vpack.c.bf16 %v1574, %v1572
    %v1599 = vpack.c.bf16 %v1577, %v1575
    %v1600 = vpack.c.bf16 %v1578, %v1576
    %v1601 = vpack.c.bf16 %v1581, %v1579
    %v1602 = vpack.c.bf16 %v1582, %v1580
    %v1603 = vpack.c.bf16 %v1585, %v1583
    %v1604 = vpack.c.bf16 %v1586, %v1584
    %v1605 = vpack.c.bf16 %v1589, %v1587
    %v1606 = vpack.c.bf16 %v1590, %v1588
    %v1607 = vld [vmem:[#allocation7] sm:$0xff]
    %v1608 = vld [vmem:[#allocation7 + $0x8] sm:$0xff]
    %v1609 = vld [vmem:[#allocation7 + $0x10] sm:$0xff]
    %v1610 = vld [vmem:[#allocation7 + $0x18] sm:$0xff]
    %v1611 = vld [vmem:[#allocation7 + $0x20] sm:$0xff]
    %v1612 = vld [vmem:[#allocation7 + $0x28] sm:$0xff]
    %v1613 = vld [vmem:[#allocation7 + $0x30] sm:$0xff]
    %v1614 = vld [vmem:[#allocation7 + $0x38] sm:$0xff]
    %v1615 = vld [vmem:[#allocation7 + $0x40] sm:$0xff]
    %v1616 = vld [vmem:[#allocation7 + $0x48] sm:$0xff]
    %v1617 = vld [vmem:[#allocation7 + $0x50] sm:$0xff]
    %v1618 = vld [vmem:[#allocation7 + $0x58] sm:$0xff]
    %v1619 = vld [vmem:[#allocation7 + $0x60] sm:$0xff]
    %v1620 = vld [vmem:[#allocation7 + $0x68] sm:$0xff]
    %v1621 = vld [vmem:[#allocation7 + $0x70] sm:$0xff]
    %v1622 = vld [vmem:[#allocation7 + $0x78] sm:$0xff]
    %v1623 = vld [vmem:[#allocation7 + $0x80] sm:$0xff]
    %v1624 = vld [vmem:[#allocation7 + $0x88] sm:$0xff]
    %v1625 = vld [vmem:[#allocation7 + $0x90] sm:$0xff]
    %v1626 = vld [vmem:[#allocation7 + $0x98] sm:$0xff]
    %v1627 = vld [vmem:[#allocation7 + $0xa0] sm:$0xff]
    %v1628 = vld [vmem:[#allocation7 + $0xa8] sm:$0xff]
    %v1629 = vld [vmem:[#allocation7 + $0xb0] sm:$0xff]
    %v1630 = vld [vmem:[#allocation7 + $0xb8] sm:$0xff]
    %v1631 = vld [vmem:[#allocation7 + $0xc0] sm:$0xff]
    %v1632 = vld [vmem:[#allocation7 + $0xc8] sm:$0xff]
    %v1633 = vld [vmem:[#allocation7 + $0xd0] sm:$0xff]
    %v1634 = vld [vmem:[#allocation7 + $0xd8] sm:$0xff]
    %v1635 = vld [vmem:[#allocation7 + $0xe0] sm:$0xff]
    %v1636 = vld [vmem:[#allocation7 + $0xe8] sm:$0xff]
    %v1637 = vld [vmem:[#allocation7 + $0xf0] sm:$0xff]
    %v1638 = vld [vmem:[#allocation7 + $0xf8] sm:$0xff]
    %v1639 = vld [vmem:[%s4] sm:$0x3]
    %v1641 = vlaneseq
    %v1642 = vshrl.u32 %v1641, 7
    %v1643 = vsub.s32 0, %v1642
    %v1644 = vrot.slane %v1639, %v1643
    %v1645 = vlaneseq
    %v1646 = vshrl.u32 %v1645, 7
    %v1647 = vsub.s32 1, %v1646
    %v1648 = vrot.slane %v1639, %v1647
    %v1683 = vunpack.c.l.b16 %v1607
    %v1684 = vunpack.c.h.b16 %v1607
    %v1685 = vunpack.c.l.b16 %v1608
    %v1686 = vunpack.c.h.b16 %v1608
    %v1687 = vunpack.c.l.b16 %v1609
    %v1688 = vunpack.c.h.b16 %v1609
    %v1689 = vunpack.c.l.b16 %v1610
    %v1690 = vunpack.c.h.b16 %v1610
    %v1691 = vunpack.c.l.b16 %v1611
    %v1692 = vunpack.c.h.b16 %v1611
    %v1693 = vunpack.c.l.b16 %v1612
    %v1694 = vunpack.c.h.b16 %v1612
    %v1695 = vunpack.c.l.b16 %v1613
    %v1696 = vunpack.c.h.b16 %v1613
    %v1697 = vunpack.c.l.b16 %v1614
    %v1698 = vunpack.c.h.b16 %v1614
    %v1699 = vunpack.c.l.b16 %v1615
    %v1700 = vunpack.c.h.b16 %v1615
    %v1701 = vunpack.c.l.b16 %v1616
    %v1702 = vunpack.c.h.b16 %v1616
    %v1703 = vunpack.c.l.b16 %v1617
    %v1704 = vunpack.c.h.b16 %v1617
    %v1705 = vunpack.c.l.b16 %v1618
    %v1706 = vunpack.c.h.b16 %v1618
    %v1707 = vunpack.c.l.b16 %v1619
    %v1708 = vunpack.c.h.b16 %v1619
    %v1709 = vunpack.c.l.b16 %v1620
    %v1710 = vunpack.c.h.b16 %v1620
    %v1711 = vunpack.c.l.b16 %v1621
    %v1712 = vunpack.c.h.b16 %v1621
    %v1713 = vunpack.c.l.b16 %v1622
    %v1714 = vunpack.c.h.b16 %v1622
    %v1715 = vunpack.c.l.b16 %v1623
    %v1716 = vunpack.c.h.b16 %v1623
    %v1717 = vunpack.c.l.b16 %v1624
    %v1718 = vunpack.c.h.b16 %v1624
    %v1719 = vunpack.c.l.b16 %v1625
    %v1720 = vunpack.c.h.b16 %v1625
    %v1721 = vunpack.c.l.b16 %v1626
    %v1722 = vunpack.c.h.b16 %v1626
    %v1723 = vunpack.c.l.b16 %v1627
    %v1724 = vunpack.c.h.b16 %v1627
    %v1725 = vunpack.c.l.b16 %v1628
    %v1726 = vunpack.c.h.b16 %v1628
    %v1727 = vunpack.c.l.b16 %v1629
    %v1728 = vunpack.c.h.b16 %v1629
    %v1729 = vunpack.c.l.b16 %v1630
    %v1730 = vunpack.c.h.b16 %v1630
    %v1731 = vunpack.c.l.b16 %v1631
    %v1732 = vunpack.c.h.b16 %v1631
    %v1733 = vunpack.c.l.b16 %v1632
    %v1734 = vunpack.c.h.b16 %v1632
    %v1735 = vunpack.c.l.b16 %v1633
    %v1736 = vunpack.c.h.b16 %v1633
    %v1737 = vunpack.c.l.b16 %v1634
    %v1738 = vunpack.c.h.b16 %v1634
    %v1739 = vunpack.c.l.b16 %v1635
    %v1740 = vunpack.c.h.b16 %v1635
    %v1741 = vunpack.c.l.b16 %v1636
    %v1742 = vunpack.c.h.b16 %v1636
    %v1743 = vunpack.c.l.b16 %v1637
    %v1744 = vunpack.c.h.b16 %v1637
    %v1745 = vunpack.c.l.b16 %v1638
    %v1746 = vunpack.c.h.b16 %v1638
    %v1747 = vpack.c.b16 %v1685, %v1683
    %v1748 = vpack.c.b16 %v1686, %v1684
    %v1749 = vpack.c.b16 %v1689, %v1687
    %v1750 = vpack.c.b16 %v1690, %v1688
    %v1751 = vpack.c.b16 %v1693, %v1691
    %v1752 = vpack.c.b16 %v1694, %v1692
    %v1753 = vpack.c.b16 %v1697, %v1695
    %v1754 = vpack.c.b16 %v1698, %v1696
    %v1755 = vpack.c.b16 %v1701, %v1699
    %v1756 = vpack.c.b16 %v1702, %v1700
    %v1757 = vpack.c.b16 %v1705, %v1703
    %v1758 = vpack.c.b16 %v1706, %v1704
    %v1759 = vpack.c.b16 %v1709, %v1707
    %v1760 = vpack.c.b16 %v1710, %v1708
    %v1761 = vpack.c.b16 %v1713, %v1711
    %v1762 = vpack.c.b16 %v1714, %v1712
    %v1763 = vpack.c.b16 %v1717, %v1715
    %v1764 = vpack.c.b16 %v1718, %v1716
    %v1765 = vpack.c.b16 %v1721, %v1719
    %v1766 = vpack.c.b16 %v1722, %v1720
    %v1767 = vpack.c.b16 %v1725, %v1723
    %v1768 = vpack.c.b16 %v1726, %v1724
    %v1769 = vpack.c.b16 %v1729, %v1727
    %v1770 = vpack.c.b16 %v1730, %v1728
    %v1771 = vpack.c.b16 %v1733, %v1731
    %v1772 = vpack.c.b16 %v1734, %v1732
    %v1773 = vpack.c.b16 %v1737, %v1735
    %v1774 = vpack.c.b16 %v1738, %v1736
    %v1775 = vpack.c.b16 %v1741, %v1739
    %v1776 = vpack.c.b16 %v1742, %v1740
    %v1777 = vpack.c.b16 %v1745, %v1743
    %v1778 = vpack.c.b16 %v1746, %v1744
    %1811 = vmatprep.subr.bf16.mxu0 %v1762
    %1812 = vmatpush1.bf16.msra.mxu0 %v1761
    %1813 = vmatprep.subr.bf16.mxu0 %v1760
    %1814 = vmatpush1.bf16.msra.mxu0 %v1759
    %1815 = vmatprep.subr.bf16.mxu0 %v1758
    %1816 = vmatpush1.bf16.msra.mxu0 %v1757
    %1817 = vmatprep.subr.bf16.mxu0 %v1756
    %1818 = vmatpush1.bf16.msra.mxu0 %v1755
    %1819 = vmatprep.subr.bf16.mxu0 %v1754
    %1820 = vmatpush1.bf16.msra.mxu0 %v1753
    %1821 = vmatprep.subr.bf16.mxu0 %v1752
    %1822 = vmatpush1.bf16.msra.mxu0 %v1751
    %1823 = vmatprep.subr.bf16.mxu0 %v1750
    %1824 = vmatpush1.bf16.msra.mxu0 %v1749
    %1825 = vmatprep.subr.bf16.mxu0 %v1748
    %1826 = vmatpush1.bf16.msra.mxu0 %v1747
    %1827 = vmatprep.subr.bf16.mxu0 %v1778
    %1828 = vmatpush2.bf16.msra.mxu0 %v1777
    %1829 = vmatprep.subr.bf16.mxu0 %v1776
    %1830 = vmatpush2.bf16.msra.mxu0 %v1775
    %1831 = vmatprep.subr.bf16.mxu0 %v1774
    %1832 = vmatpush2.bf16.msra.mxu0 %v1773
    %1833 = vmatprep.subr.bf16.mxu0 %v1772
    %1834 = vmatpush2.bf16.msra.mxu0 %v1771
    %1835 = vmatprep.subr.bf16.mxu0 %v1770
    %1836 = vmatpush2.bf16.msra.mxu0 %v1769
    %1837 = vmatprep.subr.bf16.mxu0 %v1768
    %1838 = vmatpush2.bf16.msra.mxu0 %v1767
    %1839 = vmatprep.subr.bf16.mxu0 %v1766
    %1840 = vmatpush2.bf16.msra.mxu0 %v1765
    %1841 = vmatprep.subr.bf16.mxu0 %v1764
    %1842 = vmatpush2.bf16.msra.mxu0 %v1763
    %1843 = vmatprep.mubr.bf16.mxu0 %v1592
    %1844 = vmatmul.mubr.bf16.gmra.mxu0 %v1591
    %v1845 = vpop.f32.mrf.mxu0
    %v1846 = vadd.f32 %v1644, %v1845
    %v1847 = vpop.f32.mrf.mxu0
    %v1848 = vadd.f32 %v1648, %v1847
    %v1849 = vpop.f32.mrf.mxu0
    %v1850 = vadd.f32 %v1644, %v1849
    %v1851 = vpop.f32.mrf.mxu0
    %v1852 = vadd.f32 %v1648, %v1851
    %1853 = vmatprep.mubr.bf16.mxu0 %v1594
    %1854 = vmatmul.mubr.bf16.gmra.mxu0 %v1593
    %v1855 = vpop.f32.mrf.mxu0
    %v1856 = vadd.f32 %v1644, %v1855
    %v1857 = vpop.f32.mrf.mxu0
    %v1858 = vadd.f32 %v1648, %v1857
    %v1859 = vpop.f32.mrf.mxu0
    %v1860 = vadd.f32 %v1644, %v1859
    %v1861 = vpop.f32.mrf.mxu0
    %v1862 = vadd.f32 %v1648, %v1861
    %1863 = vmatprep.mubr.bf16.mxu0 %v1596
    %1864 = vmatmul.mubr.bf16.gmra.mxu0 %v1595
    %v1865 = vpop.f32.mrf.mxu0
    %v1866 = vadd.f32 %v1644, %v1865
    %v1867 = vpop.f32.mrf.mxu0
    %v1868 = vadd.f32 %v1648, %v1867
    %v1869 = vpop.f32.mrf.mxu0
    %v1870 = vadd.f32 %v1644, %v1869
    %v1871 = vpop.f32.mrf.mxu0
    %v1872 = vadd.f32 %v1648, %v1871
    %1873 = vmatprep.mubr.bf16.mxu0 %v1598
    %1874 = vmatmul.mubr.bf16.gmra.mxu0 %v1597
    %v1875 = vpop.f32.mrf.mxu0
    %v1876 = vadd.f32 %v1644, %v1875
    %v1877 = vpop.f32.mrf.mxu0
    %v1878 = vadd.f32 %v1648, %v1877
    %v1879 = vpop.f32.mrf.mxu0
    %v1880 = vadd.f32 %v1644, %v1879
    %v1881 = vpop.f32.mrf.mxu0
    %v1882 = vadd.f32 %v1648, %v1881
    %1883 = vmatprep.mubr.bf16.mxu0 %v1600
    %1884 = vmatmul.mubr.bf16.gmra.mxu0 %v1599
    %v1885 = vpop.f32.mrf.mxu0
    %v1886 = vadd.f32 %v1644, %v1885
    %v1887 = vpop.f32.mrf.mxu0
    %v1888 = vadd.f32 %v1648, %v1887
    %v1889 = vpop.f32.mrf.mxu0
    %v1890 = vadd.f32 %v1644, %v1889
    %v1891 = vpop.f32.mrf.mxu0
    %v1892 = vadd.f32 %v1648, %v1891
    %1893 = vmatprep.mubr.bf16.mxu0 %v1602
    %1894 = vmatmul.mubr.bf16.gmra.mxu0 %v1601
    %v1895 = vpop.f32.mrf.mxu0
    %v1896 = vadd.f32 %v1644, %v1895
    %v1897 = vpop.f32.mrf.mxu0
    %v1898 = vadd.f32 %v1648, %v1897
    %v1899 = vpop.f32.mrf.mxu0
    %v1900 = vadd.f32 %v1644, %v1899
    %v1901 = vpop.f32.mrf.mxu0
    %v1902 = vadd.f32 %v1648, %v1901
    %1903 = vmatprep.mubr.bf16.mxu0 %v1604
    %1904 = vmatmul.mubr.bf16.gmra.mxu0 %v1603
    %v1905 = vpop.f32.mrf.mxu0
    %v1906 = vadd.f32 %v1644, %v1905
    %v1907 = vpop.f32.mrf.mxu0
    %v1908 = vadd.f32 %v1648, %v1907
    %v1909 = vpop.f32.mrf.mxu0
    %v1910 = vadd.f32 %v1644, %v1909
    %v1911 = vpop.f32.mrf.mxu0
    %v1912 = vadd.f32 %v1648, %v1911
    %1913 = vmatprep.mubr.bf16.mxu0 %v1606
    %1914 = vmatmul.mubr.bf16.gmra.mxu0 %v1605
    %v1915 = vpop.f32.mrf.mxu0
    %v1916 = vadd.f32 %v1644, %v1915
    %v1917 = vpop.f32.mrf.mxu0
    %v1918 = vadd.f32 %v1648, %v1917
    %v1919 = vpop.f32.mrf.mxu0
    %v1920 = vadd.f32 %v1644, %v1919
    %v1921 = vpop.f32.mrf.mxu0
    %v1922 = vadd.f32 %v1648, %v1921
    %1923 = vdwg.mxu0
    %v1924 = vmax.f32 %v1846, 0.0
    %v1925 = vmax.f32 %v1848, 0.0
    %v1926 = vmax.f32 %v1850, 0.0
    %v1927 = vmax.f32 %v1852, 0.0
    %v1928 = vmax.f32 %v1856, 0.0
    %v1929 = vmax.f32 %v1858, 0.0
    %v1930 = vmax.f32 %v1860, 0.0
    %v1931 = vmax.f32 %v1862, 0.0
    %v1932 = vmax.f32 %v1866, 0.0
    %v1933 = vmax.f32 %v1868, 0.0
    %v1934 = vmax.f32 %v1870, 0.0
    %v1935 = vmax.f32 %v1872, 0.0
    %v1936 = vmax.f32 %v1876, 0.0
    %v1937 = vmax.f32 %v1878, 0.0
    %v1938 = vmax.f32 %v1880, 0.0
    %v1939 = vmax.f32 %v1882, 0.0
    %v1940 = vmax.f32 %v1886, 0.0
    %v1941 = vmax.f32 %v1888, 0.0
    %v1942 = vmax.f32 %v1890, 0.0
    %v1943 = vmax.f32 %v1892, 0.0
    %v1944 = vmax.f32 %v1896, 0.0
    %v1945 = vmax.f32 %v1898, 0.0
    %v1946 = vmax.f32 %v1900, 0.0
    %v1947 = vmax.f32 %v1902, 0.0
    %v1948 = vmax.f32 %v1906, 0.0
    %v1949 = vmax.f32 %v1908, 0.0
    %v1950 = vmax.f32 %v1910, 0.0
    %v1951 = vmax.f32 %v1912, 0.0
    %v1952 = vmax.f32 %v1916, 0.0
    %v1953 = vmax.f32 %v1918, 0.0
    %v1954 = vmax.f32 %v1920, 0.0
    %v1955 = vmax.f32 %v1922, 0.0
    %v1956 = vadd.f32 %v1924, %v1559
    %v1957 = vadd.f32 %v1925, %v1560
    %v1958 = vadd.f32 %v1926, %v1561
    %v1959 = vadd.f32 %v1927, %v1562
    %v1960 = vadd.f32 %v1928, %v1563
    %v1961 = vadd.f32 %v1929, %v1564
    %v1962 = vadd.f32 %v1930, %v1565
    %v1963 = vadd.f32 %v1931, %v1566
    %v1964 = vadd.f32 %v1932, %v1567
    %v1965 = vadd.f32 %v1933, %v1568
    %v1966 = vadd.f32 %v1934, %v1569
    %v1967 = vadd.f32 %v1935, %v1570
    %v1968 = vadd.f32 %v1936, %v1571
    %v1969 = vadd.f32 %v1937, %v1572
    %v1970 = vadd.f32 %v1938, %v1573
    %v1971 = vadd.f32 %v1939, %v1574
    %v1972 = vadd.f32 %v1940, %v1575
    %v1973 = vadd.f32 %v1941, %v1576
    %v1974 = vadd.f32 %v1942, %v1577
    %v1975 = vadd.f32 %v1943, %v1578
    %v1976 = vadd.f32 %v1944, %v1579
    %v1977 = vadd.f32 %v1945, %v1580
    %v1978 = vadd.f32 %v1946, %v1581
    %v1979 = vadd.f32 %v1947, %v1582
    %v1980 = vadd.f32 %v1948, %v1583
    %v1981 = vadd.f32 %v1949, %v1584
    %v1982 = vadd.f32 %v1950, %v1585
    %v1983 = vadd.f32 %v1951, %v1586
    %v1984 = vadd.f32 %v1952, %v1587
    %v1985 = vadd.f32 %v1953, %v1588
    %v1986 = vadd.f32 %v1954, %v1589
    %v1987 = vadd.f32 %v1955, %v1590
    %v1988 = vpack.c.bf16 %v1958, %v1956
    %v1989 = vpack.c.bf16 %v1959, %v1957
    %v1990 = vpack.c.bf16 %v1962, %v1960
    %v1991 = vpack.c.bf16 %v1963, %v1961
    %v1992 = vpack.c.bf16 %v1966, %v1964
    %v1993 = vpack.c.bf16 %v1967, %v1965
    %v1994 = vpack.c.bf16 %v1970, %v1968
    %v1995 = vpack.c.bf16 %v1971, %v1969
    %v1996 = vpack.c.bf16 %v1974, %v1972
    %v1997 = vpack.c.bf16 %v1975, %v1973
    %v1998 = vpack.c.bf16 %v1978, %v1976
    %v1999 = vpack.c.bf16 %v1979, %v1977
    %v2000 = vpack.c.bf16 %v1982, %v1980
    %v2001 = vpack.c.bf16 %v1983, %v1981
    %v2002 = vpack.c.bf16 %v1986, %v1984
    %v2003 = vpack.c.bf16 %v1987, %v1985
    %v2004 = vld [vmem:[#allocation8] sm:$0xf]
    %v2005 = vld [vmem:[#allocation8 + $0x4] sm:$0xf]
    %v2006 = vld [vmem:[#allocation8 + $0x8] sm:$0xf]
    %v2007 = vld [vmem:[#allocation8 + $0xc] sm:$0xf]
    %v2008 = vld [vmem:[#allocation8 + $0x10] sm:$0xf]
    %v2009 = vld [vmem:[#allocation8 + $0x14] sm:$0xf]
    %v2010 = vld [vmem:[#allocation8 + $0x18] sm:$0xf]
    %v2011 = vld [vmem:[#allocation8 + $0x1c] sm:$0xf]
    %v2012 = vld [vmem:[#allocation8 + $0x20] sm:$0xf]
    %v2013 = vld [vmem:[#allocation8 + $0x24] sm:$0xf]
    %v2014 = vld [vmem:[#allocation8 + $0x28] sm:$0xf]
    %v2015 = vld [vmem:[#allocation8 + $0x2c] sm:$0xf]
    %v2016 = vld [vmem:[#allocation8 + $0x30] sm:$0xf]
    %v2017 = vld [vmem:[#allocation8 + $0x34] sm:$0xf]
    %v2018 = vld [vmem:[#allocation8 + $0x38] sm:$0xf]
    %v2019 = vld [vmem:[#allocation8 + $0x3c] sm:$0xf]
    %v2020 = vld [vmem:[#allocation8 + $0x40] sm:$0xf]
    %v2021 = vld [vmem:[#allocation8 + $0x44] sm:$0xf]
    %v2022 = vld [vmem:[#allocation8 + $0x48] sm:$0xf]
    %v2023 = vld [vmem:[#allocation8 + $0x4c] sm:$0xf]
    %v2024 = vld [vmem:[#allocation8 + $0x50] sm:$0xf]
    %v2025 = vld [vmem:[#allocation8 + $0x54] sm:$0xf]
    %v2026 = vld [vmem:[#allocation8 + $0x58] sm:$0xf]
    %v2027 = vld [vmem:[#allocation8 + $0x5c] sm:$0xf]
    %v2028 = vld [vmem:[#allocation8 + $0x60] sm:$0xf]
    %v2029 = vld [vmem:[#allocation8 + $0x64] sm:$0xf]
    %v2030 = vld [vmem:[#allocation8 + $0x68] sm:$0xf]
    %v2031 = vld [vmem:[#allocation8 + $0x6c] sm:$0xf]
    %v2032 = vld [vmem:[#allocation8 + $0x70] sm:$0xf]
    %v2033 = vld [vmem:[#allocation8 + $0x74] sm:$0xf]
    %v2034 = vld [vmem:[#allocation8 + $0x78] sm:$0xf]
    %v2035 = vld [vmem:[#allocation8 + $0x7c] sm:$0xf]
    %v2036 = vld [vmem:[%s6] sm:$0x1]
    %v2038 = vlaneseq
    %v2039 = vshrl.u32 %v2038, 7
    %v2040 = vsub.s32 0, %v2039
    %v2041 = vrot.slane %v2036, %v2040
    %v2075 = vunpack.c.l.b16 %v2004
    %v2076 = vunpack.c.l.b16 %v2005
    %v2077 = vunpack.c.l.b16 %v2006
    %v2078 = vunpack.c.l.b16 %v2007
    %v2079 = vunpack.c.l.b16 %v2008
    %v2080 = vunpack.c.l.b16 %v2009
    %v2081 = vunpack.c.l.b16 %v2010
    %v2082 = vunpack.c.l.b16 %v2011
    %v2083 = vunpack.c.l.b16 %v2012
    %v2084 = vunpack.c.l.b16 %v2013
    %v2085 = vunpack.c.l.b16 %v2014
    %v2086 = vunpack.c.l.b16 %v2015
    %v2087 = vunpack.c.l.b16 %v2016
    %v2088 = vunpack.c.l.b16 %v2017
    %v2089 = vunpack.c.l.b16 %v2018
    %v2090 = vunpack.c.l.b16 %v2019
    %v2091 = vunpack.c.l.b16 %v2020
    %v2092 = vunpack.c.l.b16 %v2021
    %v2093 = vunpack.c.l.b16 %v2022
    %v2094 = vunpack.c.l.b16 %v2023
    %v2095 = vunpack.c.l.b16 %v2024
    %v2096 = vunpack.c.l.b16 %v2025
    %v2097 = vunpack.c.l.b16 %v2026
    %v2098 = vunpack.c.l.b16 %v2027
    %v2099 = vunpack.c.l.b16 %v2028
    %v2100 = vunpack.c.l.b16 %v2029
    %v2101 = vunpack.c.l.b16 %v2030
    %v2102 = vunpack.c.l.b16 %v2031
    %v2103 = vunpack.c.l.b16 %v2032
    %v2104 = vunpack.c.l.b16 %v2033
    %v2105 = vunpack.c.l.b16 %v2034
    %v2106 = vunpack.c.l.b16 %v2035
    %v2107 = vpack.c.b16 %v2076, %v2075
    %v2108 = vpack.c.b16 %v2078, %v2077
    %v2109 = vpack.c.b16 %v2080, %v2079
    %v2110 = vpack.c.b16 %v2082, %v2081
    %v2111 = vpack.c.b16 %v2084, %v2083
    %v2112 = vpack.c.b16 %v2086, %v2085
    %v2113 = vpack.c.b16 %v2088, %v2087
    %v2114 = vpack.c.b16 %v2090, %v2089
    %v2115 = vpack.c.b16 %v2092, %v2091
    %v2116 = vpack.c.b16 %v2094, %v2093
    %v2117 = vpack.c.b16 %v2096, %v2095
    %v2118 = vpack.c.b16 %v2098, %v2097
    %v2119 = vpack.c.b16 %v2100, %v2099
    %v2120 = vpack.c.b16 %v2102, %v2101
    %v2121 = vpack.c.b16 %v2104, %v2103
    %v2122 = vpack.c.b16 %v2106, %v2105
    %2139 = vmatprep.subr.bf16.mxu0 0
    %2140 = vmatpush1.bf16.msra.mxu0 %v2114
    %2141 = vmatprep.subr.bf16.mxu0 0
    %2142 = vmatpush1.bf16.msra.mxu0 %v2113
    %2143 = vmatprep.subr.bf16.mxu0 0
    %2144 = vmatpush1.bf16.msra.mxu0 %v2112
    %2145 = vmatprep.subr.bf16.mxu0 0
    %2146 = vmatpush1.bf16.msra.mxu0 %v2111
    %2147 = vmatprep.subr.bf16.mxu0 0
    %2148 = vmatpush1.bf16.msra.mxu0 %v2110
    %2149 = vmatprep.subr.bf16.mxu0 0
    %2150 = vmatpush1.bf16.msra.mxu0 %v2109
    %2151 = vmatprep.subr.bf16.mxu0 0
    %2152 = vmatpush1.bf16.msra.mxu0 %v2108
    %2153 = vmatprep.subr.bf16.mxu0 0
    %2154 = vmatpush1.bf16.msra.mxu0 %v2107
    %2155 = vmatprep.subr.bf16.mxu0 0
    %2156 = vmatpush2.bf16.msra.mxu0 %v2122
    %2157 = vmatprep.subr.bf16.mxu0 0
    %2158 = vmatpush2.bf16.msra.mxu0 %v2121
    %2159 = vmatprep.subr.bf16.mxu0 0
    %2160 = vmatpush2.bf16.msra.mxu0 %v2120
    %2161 = vmatprep.subr.bf16.mxu0 0
    %2162 = vmatpush2.bf16.msra.mxu0 %v2119
    %2163 = vmatprep.subr.bf16.mxu0 0
    %2164 = vmatpush2.bf16.msra.mxu0 %v2118
    %2165 = vmatprep.subr.bf16.mxu0 0
    %2166 = vmatpush2.bf16.msra.mxu0 %v2117
    %2167 = vmatprep.subr.bf16.mxu0 0
    %2168 = vmatpush2.bf16.msra.mxu0 %v2116
    %2169 = vmatprep.subr.bf16.mxu0 0
    %2170 = vmatpush2.bf16.msra.mxu0 %v2115
    %2171 = vmatprep.mubr.bf16.mxu0 %v1989
    %2172 = vmatmul.mubr.bf16.gmra.mxu0 %v1988
    %v2173 = vpop.f32.mrf.mxu0
    %v2174 = vadd.f32 %v2041, %v2173
    %v2175 = vpop.f32.mrf.mxu0
    %v2176 = vpop.f32.mrf.mxu0
    %v2177 = vadd.f32 %v2041, %v2176
    %v2178 = vpop.f32.mrf.mxu0
    %2179 = vmatprep.mubr.bf16.mxu0 %v1991
    %2180 = vmatmul.mubr.bf16.gmra.mxu0 %v1990
    %v2181 = vpop.f32.mrf.mxu0
    %v2182 = vadd.f32 %v2041, %v2181
    %v2183 = vpop.f32.mrf.mxu0
    %v2184 = vpop.f32.mrf.mxu0
    %v2185 = vadd.f32 %v2041, %v2184
    %v2186 = vpop.f32.mrf.mxu0
    %2187 = vmatprep.mubr.bf16.mxu0 %v1993
    %2188 = vmatmul.mubr.bf16.gmra.mxu0 %v1992
    %v2189 = vpop.f32.mrf.mxu0
    %v2190 = vadd.f32 %v2041, %v2189
    %v2191 = vpop.f32.mrf.mxu0
    %v2192 = vpop.f32.mrf.mxu0
    %v2193 = vadd.f32 %v2041, %v2192
    %v2194 = vpop.f32.mrf.mxu0
    %2195 = vmatprep.mubr.bf16.mxu0 %v1995
    %2196 = vmatmul.mubr.bf16.gmra.mxu0 %v1994
    %v2197 = vpop.f32.mrf.mxu0
    %v2198 = vadd.f32 %v2041, %v2197
    %v2199 = vpop.f32.mrf.mxu0
    %v2200 = vpop.f32.mrf.mxu0
    %v2201 = vadd.f32 %v2041, %v2200
    %v2202 = vpop.f32.mrf.mxu0
    %2203 = vmatprep.mubr.bf16.mxu0 %v1997
    %2204 = vmatmul.mubr.bf16.gmra.mxu0 %v1996
    %v2205 = vpop.f32.mrf.mxu0
    %v2206 = vadd.f32 %v2041, %v2205
    %v2207 = vpop.f32.mrf.mxu0
    %v2208 = vpop.f32.mrf.mxu0
    %v2209 = vadd.f32 %v2041, %v2208
    %v2210 = vpop.f32.mrf.mxu0
    %2211 = vmatprep.mubr.bf16.mxu0 %v1999
    %2212 = vmatmul.mubr.bf16.gmra.mxu0 %v1998
    %v2213 = vpop.f32.mrf.mxu0
    %v2214 = vadd.f32 %v2041, %v2213
    %v2215 = vpop.f32.mrf.mxu0
    %v2216 = vpop.f32.mrf.mxu0
    %v2217 = vadd.f32 %v2041, %v2216
    %v2218 = vpop.f32.mrf.mxu0
    %2219 = vmatprep.mubr.bf16.mxu0 %v2001
    %2220 = vmatmul.mubr.bf16.gmra.mxu0 %v2000
    %v2221 = vpop.f32.mrf.mxu0
    %v2222 = vadd.f32 %v2041, %v2221
    %v2223 = vpop.f32.mrf.mxu0
    %v2224 = vpop.f32.mrf.mxu0
    %v2225 = vadd.f32 %v2041, %v2224
    %v2226 = vpop.f32.mrf.mxu0
    %2227 = vmatprep.mubr.bf16.mxu0 %v2003
    %2228 = vmatmul.mubr.bf16.gmra.mxu0 %v2002
    %v2229 = vpop.f32.mrf.mxu0
    %v2230 = vadd.f32 %v2041, %v2229
    %v2231 = vpop.f32.mrf.mxu0
    %v2232 = vpop.f32.mrf.mxu0
    %v2233 = vadd.f32 %v2041, %v2232
    %v2234 = vpop.f32.mrf.mxu0
    %2235 = vdwg.mxu0
    %v2236 = vmax.f32 %v2174, 0.0
    %v2237 = vmax.f32 %v2177, 0.0
    %v2238 = vmax.f32 %v2182, 0.0
    %v2239 = vmax.f32 %v2185, 0.0
    %v2240 = vmax.f32 %v2190, 0.0
    %v2241 = vmax.f32 %v2193, 0.0
    %v2242 = vmax.f32 %v2198, 0.0
    %v2243 = vmax.f32 %v2201, 0.0
    %v2244 = vmax.f32 %v2206, 0.0
    %v2245 = vmax.f32 %v2209, 0.0
    %v2246 = vmax.f32 %v2214, 0.0
    %v2247 = vmax.f32 %v2217, 0.0
    %v2248 = vmax.f32 %v2222, 0.0
    %v2249 = vmax.f32 %v2225, 0.0
    %v2250 = vmax.f32 %v2230, 0.0
    %v2251 = vmax.f32 %v2233, 0.0
    %v2252 = vpack.c.bf16 %v2237, %v2236
    %v2253 = vpack.c.bf16 %v2239, %v2238
    %v2254 = vpack.c.bf16 %v2241, %v2240
    %v2255 = vpack.c.bf16 %v2243, %v2242
    %v2256 = vpack.c.bf16 %v2245, %v2244
    %v2257 = vpack.c.bf16 %v2247, %v2246
    %v2258 = vpack.c.bf16 %v2249, %v2248
    %v2259 = vpack.c.bf16 %v2251, %v2250
    %v2260 = vld [vmem:[#allocation10] sm:$0xf]
    %v2261 = vld [vmem:[#allocation10 + $0x4] sm:$0xf]
    %v2262 = vld [vmem:[#allocation10 + $0x8] sm:$0xf]
    %v2263 = vld [vmem:[#allocation10 + $0xc] sm:$0xf]
    %v2264 = vld [vmem:[#allocation10 + $0x10] sm:$0xf]
    %v2265 = vld [vmem:[#allocation10 + $0x14] sm:$0xf]
    %v2266 = vld [vmem:[#allocation10 + $0x18] sm:$0xf]
    %v2267 = vld [vmem:[#allocation10 + $0x1c] sm:$0xf]
    %v2268 = vld [vmem:[#allocation10 + $0x20] sm:$0xf]
    %v2269 = vld [vmem:[#allocation10 + $0x24] sm:$0xf]
    %v2270 = vld [vmem:[#allocation10 + $0x28] sm:$0xf]
    %v2271 = vld [vmem:[#allocation10 + $0x2c] sm:$0xf]
    %v2272 = vld [vmem:[#allocation10 + $0x30] sm:$0xf]
    %v2273 = vld [vmem:[#allocation10 + $0x34] sm:$0xf]
    %v2274 = vld [vmem:[#allocation10 + $0x38] sm:$0xf]
    %v2275 = vld [vmem:[#allocation10 + $0x3c] sm:$0xf]
    %v2276 = vld [vmem:[%s8] sm:$0x1]
    %v2278 = vlaneseq
    %v2279 = vshrl.u32 %v2278, 7
    %v2280 = vsub.s32 0, %v2279
    %v2281 = vrot.slane %v2276, %v2280
    %v2299 = vunpack.c.l.b16 %v2260
    %v2300 = vunpack.c.l.b16 %v2261
    %v2301 = vunpack.c.l.b16 %v2262
    %v2302 = vunpack.c.l.b16 %v2263
    %v2303 = vunpack.c.l.b16 %v2264
    %v2304 = vunpack.c.l.b16 %v2265
    %v2305 = vunpack.c.l.b16 %v2266
    %v2306 = vunpack.c.l.b16 %v2267
    %v2307 = vunpack.c.l.b16 %v2268
    %v2308 = vunpack.c.l.b16 %v2269
    %v2309 = vunpack.c.l.b16 %v2270
    %v2310 = vunpack.c.l.b16 %v2271
    %v2311 = vunpack.c.l.b16 %v2272
    %v2312 = vunpack.c.l.b16 %v2273
    %v2313 = vunpack.c.l.b16 %v2274
    %v2314 = vunpack.c.l.b16 %v2275
    %v2315 = vpack.c.b16 %v2300, %v2299
    %v2316 = vpack.c.b16 %v2302, %v2301
    %v2317 = vpack.c.b16 %v2304, %v2303
    %v2318 = vpack.c.b16 %v2306, %v2305
    %v2319 = vpack.c.b16 %v2308, %v2307
    %v2320 = vpack.c.b16 %v2310, %v2309
    %v2321 = vpack.c.b16 %v2312, %v2311
    %v2322 = vpack.c.b16 %v2314, %v2313
    %2331 = vmatprep.subr.bf16.mxu0 0
    %2332 = vmatpush1.bf16.msra.mxu0 %v2322
    %2333 = vmatprep.subr.bf16.mxu0 0
    %2334 = vmatpush1.bf16.msra.mxu0 %v2321
    %2335 = vmatprep.subr.bf16.mxu0 0
    %2336 = vmatpush1.bf16.msra.mxu0 %v2320
    %2337 = vmatprep.subr.bf16.mxu0 0
    %2338 = vmatpush1.bf16.msra.mxu0 %v2319
    %2339 = vmatprep.subr.bf16.mxu0 0
    %2340 = vmatpush1.bf16.msra.mxu0 %v2318
    %2341 = vmatprep.subr.bf16.mxu0 0
    %2342 = vmatpush1.bf16.msra.mxu0 %v2317
    %2343 = vmatprep.subr.bf16.mxu0 0
    %2344 = vmatpush1.bf16.msra.mxu0 %v2316
    %2345 = vmatprep.subr.bf16.mxu0 0
    %2346 = vmatpush1.bf16.msra.mxu0 %v2315
    %2347 = vmatprep.subr.bf16.mxu0 0
    %2348 = vmatpush2.bf16.msra.mxu0 0
    %2349 = vmatprep.subr.bf16.mxu0 0
    %2350 = vmatpush2.bf16.msra.mxu0 0
    %2351 = vmatprep.subr.bf16.mxu0 0
    %2352 = vmatpush2.bf16.msra.mxu0 0
    %2353 = vmatprep.subr.bf16.mxu0 0
    %2354 = vmatpush2.bf16.msra.mxu0 0
    %2355 = vmatprep.subr.bf16.mxu0 0
    %2356 = vmatpush2.bf16.msra.mxu0 0
    %2357 = vmatprep.subr.bf16.mxu0 0
    %2358 = vmatpush2.bf16.msra.mxu0 0
    %2359 = vmatprep.subr.bf16.mxu0 0
    %2360 = vmatpush2.bf16.msra.mxu0 0
    %2361 = vmatprep.subr.bf16.mxu0 0
    %2362 = vmatpush2.bf16.msra.mxu0 0
    %2363 = vmatprep.mubr.bf16.mxu0 0
    %2364 = vmatmul.mubr.bf16.gmra.mxu0 %v2252
    %v2365 = vpop.f32.mrf.mxu0
    %v2366 = vadd.f32 %v2281, %v2365
    %v2367 = vpop.f32.mrf.mxu0
    %v2368 = vpop.f32.mrf.mxu0
    %v2369 = vadd.f32 %v2281, %v2368
    %v2370 = vpop.f32.mrf.mxu0
    %2371 = vmatprep.mubr.bf16.mxu0 0
    %2372 = vmatmul.mubr.bf16.gmra.mxu0 %v2253
    %v2373 = vpop.f32.mrf.mxu0
    %v2374 = vadd.f32 %v2281, %v2373
    %v2375 = vpop.f32.mrf.mxu0
    %v2376 = vpop.f32.mrf.mxu0
    %v2377 = vadd.f32 %v2281, %v2376
    %v2378 = vpop.f32.mrf.mxu0
    %2379 = vmatprep.mubr.bf16.mxu0 0
    %2380 = vmatmul.mubr.bf16.gmra.mxu0 %v2254
    %v2381 = vpop.f32.mrf.mxu0
    %v2382 = vadd.f32 %v2281, %v2381
    %v2383 = vpop.f32.mrf.mxu0
    %v2384 = vpop.f32.mrf.mxu0
    %v2385 = vadd.f32 %v2281, %v2384
    %v2386 = vpop.f32.mrf.mxu0
    %2387 = vmatprep.mubr.bf16.mxu0 0
    %2388 = vmatmul.mubr.bf16.gmra.mxu0 %v2255
    %v2389 = vpop.f32.mrf.mxu0
    %v2390 = vadd.f32 %v2281, %v2389
    %v2391 = vpop.f32.mrf.mxu0
    %v2392 = vpop.f32.mrf.mxu0
    %v2393 = vadd.f32 %v2281, %v2392
    %v2394 = vpop.f32.mrf.mxu0
    %2395 = vmatprep.mubr.bf16.mxu0 0
    %2396 = vmatmul.mubr.bf16.gmra.mxu0 %v2256
    %v2397 = vpop.f32.mrf.mxu0
    %v2398 = vadd.f32 %v2281, %v2397
    %v2399 = vpop.f32.mrf.mxu0
    %v2400 = vpop.f32.mrf.mxu0
    %v2401 = vadd.f32 %v2281, %v2400
    %v2402 = vpop.f32.mrf.mxu0
    %2403 = vmatprep.mubr.bf16.mxu0 0
    %2404 = vmatmul.mubr.bf16.gmra.mxu0 %v2257
    %v2405 = vpop.f32.mrf.mxu0
    %v2406 = vadd.f32 %v2281, %v2405
    %v2407 = vpop.f32.mrf.mxu0
    %v2408 = vpop.f32.mrf.mxu0
    %v2409 = vadd.f32 %v2281, %v2408
    %v2410 = vpop.f32.mrf.mxu0
    %2411 = vmatprep.mubr.bf16.mxu0 0
    %2412 = vmatmul.mubr.bf16.gmra.mxu0 %v2258
    %v2413 = vpop.f32.mrf.mxu0
    %v2414 = vadd.f32 %v2281, %v2413
    %v2415 = vpop.f32.mrf.mxu0
    %v2416 = vpop.f32.mrf.mxu0
    %v2417 = vadd.f32 %v2281, %v2416
    %v2418 = vpop.f32.mrf.mxu0
    %2419 = vmatprep.mubr.bf16.mxu0 0
    %2420 = vmatmul.mubr.bf16.gmra.mxu0 %v2259
    %v2421 = vpop.f32.mrf.mxu0
    %v2422 = vadd.f32 %v2281, %v2421
    %v2423 = vpop.f32.mrf.mxu0
    %v2424 = vpop.f32.mrf.mxu0
    %v2425 = vadd.f32 %v2281, %v2424
    %v2426 = vpop.f32.mrf.mxu0
    %2427 = vdwg.mxu0
    %v2428 = vmax.f32 %v2366, 0.0
    %v2429 = vmax.f32 %v2369, 0.0
    %v2430 = vmax.f32 %v2374, 0.0
    %v2431 = vmax.f32 %v2377, 0.0
    %v2432 = vmax.f32 %v2382, 0.0
    %v2433 = vmax.f32 %v2385, 0.0
    %v2434 = vmax.f32 %v2390, 0.0
    %v2435 = vmax.f32 %v2393, 0.0
    %v2436 = vmax.f32 %v2398, 0.0
    %v2437 = vmax.f32 %v2401, 0.0
    %v2438 = vmax.f32 %v2406, 0.0
    %v2439 = vmax.f32 %v2409, 0.0
    %v2440 = vmax.f32 %v2414, 0.0
    %v2441 = vmax.f32 %v2417, 0.0
    %v2442 = vmax.f32 %v2422, 0.0
    %v2443 = vmax.f32 %v2425, 0.0
    %v2444 = vadd.f32 %v2428, %v2236
    %v2445 = vadd.f32 %v2429, %v2237
    %v2446 = vadd.f32 %v2430, %v2238
    %v2447 = vadd.f32 %v2431, %v2239
    %v2448 = vadd.f32 %v2432, %v2240
    %v2449 = vadd.f32 %v2433, %v2241
    %v2450 = vadd.f32 %v2434, %v2242
    %v2451 = vadd.f32 %v2435, %v2243
    %v2452 = vadd.f32 %v2436, %v2244
    %v2453 = vadd.f32 %v2437, %v2245
    %v2454 = vadd.f32 %v2438, %v2246
    %v2455 = vadd.f32 %v2439, %v2247
    %v2456 = vadd.f32 %v2440, %v2248
    %v2457 = vadd.f32 %v2441, %v2249
    %v2458 = vadd.f32 %v2442, %v2250
    %v2459 = vadd.f32 %v2443, %v2251
    %v2460 = vld [vmem:[%s9] sm:$0x1]
    %v2462 = vlaneseq
    %v2463 = vshrl.u32 %v2462, 7
    %v2464 = vsub.s32 0, %v2463
    %v2465 = vrot.slane %v2460, %v2464
    %v2467 = vmul.f32 %v2444, %v2465
    %v2468 = vmul.f32 %v2445, %v2465
    %v2469 = vmul.f32 %v2446, %v2465
    %v2470 = vmul.f32 %v2447, %v2465
    %v2471 = vmul.f32 %v2448, %v2465
    %v2472 = vmul.f32 %v2449, %v2465
    %v2473 = vmul.f32 %v2450, %v2465
    %v2474 = vmul.f32 %v2451, %v2465
    %v2475 = vmul.f32 %v2452, %v2465
    %v2476 = vmul.f32 %v2453, %v2465
    %v2477 = vmul.f32 %v2454, %v2465
    %v2478 = vmul.f32 %v2455, %v2465
    %v2479 = vmul.f32 %v2456, %v2465
    %v2480 = vmul.f32 %v2457, %v2465
    %v2481 = vmul.f32 %v2458, %v2465
    %v2482 = vmul.f32 %v2459, %v2465
    %2483 = vadd.xlane.f32.xlu0 %v2467
    %v2484 = vpop.xlane.xlu0 %2483
    %2485 = vadd.xlane.f32.xlu0 %v2468
    %v2486 = vpop.xlane.xlu0 %2485
    %2487 = vadd.xlane.f32.xlu0 %v2469
    %v2488 = vpop.xlane.xlu0 %2487
    %2489 = vadd.xlane.f32.xlu0 %v2470
    %v2490 = vpop.xlane.xlu0 %2489
    %2491 = vadd.xlane.f32.xlu0 %v2471
    %v2492 = vpop.xlane.xlu0 %2491
    %2493 = vadd.xlane.f32.xlu0 %v2472
    %v2494 = vpop.xlane.xlu0 %2493
    %2495 = vadd.xlane.f32.xlu0 %v2473
    %v2496 = vpop.xlane.xlu0 %2495
    %2497 = vadd.xlane.f32.xlu0 %v2474
    %v2498 = vpop.xlane.xlu0 %2497
    %2499 = vadd.xlane.f32.xlu0 %v2475
    %v2500 = vpop.xlane.xlu0 %2499
    %2501 = vadd.xlane.f32.xlu0 %v2476
    %v2502 = vpop.xlane.xlu0 %2501
    %2503 = vadd.xlane.f32.xlu0 %v2477
    %v2504 = vpop.xlane.xlu0 %2503
    %2505 = vadd.xlane.f32.xlu0 %v2478
    %v2506 = vpop.xlane.xlu0 %2505
    %2507 = vadd.xlane.f32.xlu0 %v2479
    %v2508 = vpop.xlane.xlu0 %2507
    %2509 = vadd.xlane.f32.xlu0 %v2480
    %v2510 = vpop.xlane.xlu0 %2509
    %2511 = vadd.xlane.f32.xlu0 %v2481
    %v2512 = vpop.xlane.xlu0 %2511
    %2513 = vadd.xlane.f32.xlu0 %v2482
    %v2514 = vpop.xlane.xlu0 %2513
    %v2515 = vld [vmem:[#allocation2] sm:$0x1]
    %2517 = vset.pattern.permute.xlu0 0
    %2518 = vperm.xlu0 %2517, %v2515
    %v2519 = vpop.permute.xlu0 %2518
    %v2521 = vlaneseq
    %v2522 = vshrl.u32 %v2521, 7
    %v2523 = vsub.s32 0, %v2522
    %v2524 = vrot.slane %v2519, %v2523
    %v2525 = vadd.f32 %v2484, %v2524
    %v2526 = vadd.f32 %v2486, %v2524
    %v2527 = vadd.f32 %v2488, %v2524
    %v2528 = vadd.f32 %v2490, %v2524
    %v2529 = vadd.f32 %v2492, %v2524
    %v2530 = vadd.f32 %v2494, %v2524
    %v2531 = vadd.f32 %v2496, %v2524
    %v2532 = vadd.f32 %v2498, %v2524
    %v2533 = vadd.f32 %v2500, %v2524
    %v2534 = vadd.f32 %v2502, %v2524
    %v2535 = vadd.f32 %v2504, %v2524
    %v2536 = vadd.f32 %v2506, %v2524
    %v2537 = vadd.f32 %v2508, %v2524
    %v2538 = vadd.f32 %v2510, %v2524
    %v2539 = vadd.f32 %v2512, %v2524
    %v2540 = vadd.f32 %v2514, %v2524
    %v2557 = vlaneseq
    %v2558 = vand.u32 %v2557, 127
    %v2559 = vlaneseq
    %v2560 = vshrl.u32 %v2559, 7
    %v2561 = vsub.s32 %v2558, %v2560
    %v2562 = vrot.slane %v2525, %v2561
    %v2563 = vadd.s32 %v2558, 4294967288
    %v2564 = vlaneseq
    %v2565 = vshrl.u32 %v2564, 7
    %v2566 = vsub.s32 %v2563, %v2565
    %v2567 = vrot.slane %v2526, %v2566
    %vm2568 = vcmask 130112
    %v2569 = vsel %vm2568, %v2567, %v2562
    %v2570 = vadd.s32 %v2558, 4294967280
    %v2571 = vlaneseq
    %v2572 = vshrl.u32 %v2571, 7
    %v2573 = vsub.s32 %v2570, %v2572
    %v2574 = vrot.slane %v2527, %v2573
    %vm2575 = vcmask 195712
    %v2576 = vsel %vm2575, %v2574, %v2569
    %v2577 = vadd.s32 %v2558, 4294967272
    %v2578 = vlaneseq
    %v2579 = vshrl.u32 %v2578, 7
    %v2580 = vsub.s32 %v2577, %v2579
    %v2581 = vrot.slane %v2528, %v2580
    %vm2582 = vcmask 261312
    %v2583 = vsel %vm2582, %v2581, %v2576
    %v2584 = vadd.s32 %v2558, 4294967264
    %v2585 = vlaneseq
    %v2586 = vshrl.u32 %v2585, 7
    %v2587 = vsub.s32 %v2584, %v2586
    %v2588 = vrot.slane %v2529, %v2587
    %vm2589 = vcmask 326912
    %v2590 = vsel %vm2589, %v2588, %v2583
    %v2591 = vadd.s32 %v2558, 4294967256
    %v2592 = vlaneseq
    %v2593 = vshrl.u32 %v2592, 7
    %v2594 = vsub.s32 %v2591, %v2593
    %v2595 = vrot.slane %v2530, %v2594
    %vm2596 = vcmask 392512
    %v2597 = vsel %vm2596, %v2595, %v2590
    %v2598 = vadd.s32 %v2558, 4294967248
    %v2599 = vlaneseq
    %v2600 = vshrl.u32 %v2599, 7
    %v2601 = vsub.s32 %v2598, %v2600
    %v2602 = vrot.slane %v2531, %v2601
    %vm2603 = vcmask 458112
    %v2604 = vsel %vm2603, %v2602, %v2597
    %v2605 = vadd.s32 %v2558, 4294967240
    %v2606 = vlaneseq
    %v2607 = vshrl.u32 %v2606, 7
    %v2608 = vsub.s32 %v2605, %v2607
    %v2609 = vrot.slane %v2532, %v2608
    %vm2610 = vcmask 523712
    %v2611 = vsel %vm2610, %v2609, %v2604
    %v2612 = vadd.s32 %v2558, 4294967232
    %v2613 = vlaneseq
    %v2614 = vshrl.u32 %v2613, 7
    %v2615 = vsub.s32 %v2612, %v2614
    %v2616 = vrot.slane %v2533, %v2615
    %vm2617 = vcmask 589312
    %v2618 = vsel %vm2617, %v2616, %v2611
    %v2619 = vadd.s32 %v2558, 4294967224
    %v2620 = vlaneseq
    %v2621 = vshrl.u32 %v2620, 7
    %v2622 = vsub.s32 %v2619, %v2621
    %v2623 = vrot.slane %v2534, %v2622
    %vm2624 = vcmask 654912
    %v2625 = vsel %vm2624, %v2623, %v2618
    %v2626 = vadd.s32 %v2558, 4294967216
    %v2627 = vlaneseq
    %v2628 = vshrl.u32 %v2627, 7
    %v2629 = vsub.s32 %v2626, %v2628
    %v2630 = vrot.slane %v2535, %v2629
    %vm2631 = vcmask 720512
    %v2632 = vsel %vm2631, %v2630, %v2625
    %v2633 = vadd.s32 %v2558, 4294967208
    %v2634 = vlaneseq
    %v2635 = vshrl.u32 %v2634, 7
    %v2636 = vsub.s32 %v2633, %v2635
    %v2637 = vrot.slane %v2536, %v2636
    %vm2638 = vcmask 786112
    %v2639 = vsel %vm2638, %v2637, %v2632
    %v2640 = vadd.s32 %v2558, 4294967200
    %v2641 = vlaneseq
    %v2642 = vshrl.u32 %v2641, 7
    %v2643 = vsub.s32 %v2640, %v2642
    %v2644 = vrot.slane %v2537, %v2643
    %vm2645 = vcmask 851712
    %v2646 = vsel %vm2645, %v2644, %v2639
    %v2647 = vadd.s32 %v2558, 4294967192
    %v2648 = vlaneseq
    %v2649 = vshrl.u32 %v2648, 7
    %v2650 = vsub.s32 %v2647, %v2649
    %v2651 = vrot.slane %v2538, %v2650
    %vm2652 = vcmask 917312
    %v2653 = vsel %vm2652, %v2651, %v2646
    %v2654 = vadd.s32 %v2558, 4294967184
    %v2655 = vlaneseq
    %v2656 = vshrl.u32 %v2655, 7
    %v2657 = vsub.s32 %v2654, %v2656
    %v2658 = vrot.slane %v2539, %v2657
    %vm2659 = vcmask 982912
    %v2660 = vsel %vm2659, %v2658, %v2653
    %v2661 = vadd.s32 %v2558, 4294967176
    %v2662 = vlaneseq
    %v2663 = vshrl.u32 %v2662, 7
    %v2664 = vsub.s32 %v2661, %v2663
    %v2665 = vrot.slane %v2540, %v2664
    %vm2666 = vcmask 1048512
    %v2667 = vsel %vm2666, %v2665, %v2660
    %2669 = vst [vmem:[%s11] sm:$0x1] %v2667
    // Predicated region
    $region66: #{deep_regressor_forward.1} parent=1 // pred_check
      _
    $region67: #{deep_regressor_forward.1} parent=1 // pred_check_branch
      %2671 = sbr.rel (0) target = $region69
    $region68: #{deep_regressor_forward.1} parent=1 // pred_region
      _
    $region69: #{deep_regressor_forward.1} parent=1 // pred_fallthru
      _
    // Predicated region
    $region70: #{deep_regressor_forward.1} parent=1 // pred_check
      _
    $region71: #{deep_regressor_forward.1} parent=1 // pred_check_branch
      %2673 = sbr.rel (0) target = $region73
    $region72: #{deep_regressor_forward.1} parent=1 // pred_region
      _
    $region73: #{deep_regressor_forward.1} parent=1 // pred_fallthru
      _
    %2674 = vsyncpa [#allocation4], 1
    %2675 = vsyncpa [#allocation6], 1
    %2676 = vsyncpa [#allocation9], 1

</llo_original>
